<compile_context>
chip_gen: v7x
topology: tpu7x:2x2x1
jax: 0.10.0
libtpu: 0.0.40
codegen_flags: <defaults>
</compile_context>

<pallas_src>
import functools

import numpy as np
import jax
import jax.numpy as jnp
from jax.experimental import pallas as pl
from jax.experimental.pallas import tpu as pltpu

# ----------------------- small config (consistent with ViT) -----------------
N_IMG    = 2                      # batch
C, H, W  = 4, 16, 16              # img_shape
N_PATCH  = 4
HID      = 32                     # hidden_d
N_HEADS  = 2
N_BLOCKS = 2
OUT_D    = 10
MLP_RATIO = 4

PS      = H // N_PATCH            # patch size = 4
INPUT_D = C * PS * PS             # 64
NP2     = N_PATCH * N_PATCH       # 16 patch tokens
T       = NP2 + 1                 # 17 real tokens (patches + cls)
T_PAD   = 24                      # padded tokens per image (multiple of 8)
DH      = HID // N_HEADS          # 16 = dim_per_head
HID_MLP = MLP_RATIO * HID         # 128
QKV_W   = 4 * HID                 # 128 fused lanes: [q*m0 | q*m1 | k | v]
OUT_PAD = 128                     # lane-dense padded logits
EPS     = 1e-5                    # nn.LayerNorm default eps
NEG     = -1e30


# ----------------------------- glue (plain JAX / numpy) ---------------------
def embed_position(num_tokens, hid_d):
    i = np.arange(num_tokens)[:, None].astype(np.float64)
    j = np.arange(hid_d)[None, :]
    angle = i / 10000.0 ** ((j - (j % 2)) / hid_d)
    pos = np.where(j % 2 == 0, np.sin(angle), np.cos(angle))
    return jnp.asarray(pos, dtype=jnp.float32)


def image_to_patch(imgs, n_patch):
    n, c, h, w = imgs.shape
    ps = h // n_patch
    x = imgs.reshape(n, c, n_patch, ps, n_patch, ps)
    x = x.transpose(0, 2, 4, 1, 3, 5)                 # (n, pi, pj, c, ps, ps)
    return x.reshape(n, n_patch * n_patch, c * ps * ps)


def init_params(key):
    def uinit(k, shape, fan_in):
        b = 1.0 / np.sqrt(fan_in)
        return jax.random.uniform(k, shape, jnp.float32, -b, b)

    ks = jax.random.split(key, 16)
    p = {}
    p["lin_w"] = uinit(ks[0], (INPUT_D, HID), INPUT_D)
    p["lin_b"] = uinit(ks[1], (1, HID), INPUT_D)
    p["cls"]   = jax.random.uniform(ks[2], (1, HID), jnp.float32)   # torch.rand
    p["pos"]   = embed_position(T, HID)
    # LayerNorm defaults: gamma=1, beta=0
    p["n1g"] = jnp.ones((N_BLOCKS, 1, HID), jnp.float32)
    p["n1b"] = jnp.zeros((N_BLOCKS, 1, HID), jnp.float32)
    p["n2g"] = jnp.ones((N_BLOCKS, 1, HID), jnp.float32)
    p["n2b"] = jnp.zeros((N_BLOCKS, 1, HID), jnp.float32)
    # per-head Q/K/V linear layers, stacked over (block, head); (in, out) layout
    p["qw"] = uinit(ks[3], (N_BLOCKS, N_HEADS, DH, DH), DH)
    p["qb"] = uinit(ks[4], (N_BLOCKS, N_HEADS, 1, DH), DH)
    p["kw"] = uinit(ks[5], (N_BLOCKS, N_HEADS, DH, DH), DH)
    p["kb"] = uinit(ks[6], (N_BLOCKS, N_HEADS, 1, DH), DH)
    p["vw"] = uinit(ks[7], (N_BLOCKS, N_HEADS, DH, DH), DH)
    p["vb"] = uinit(ks[8], (N_BLOCKS, N_HEADS, 1, DH), DH)
    # MLP
    p["m1w"] = uinit(ks[9], (N_BLOCKS, HID, HID_MLP), HID)
    p["m1b"] = uinit(ks[10], (N_BLOCKS, 1, HID_MLP), HID)
    p["m2w"] = uinit(ks[11], (N_BLOCKS, HID_MLP, HID), HID_MLP)
    p["m2b"] = uinit(ks[12], (N_BLOCKS, 1, HID), HID_MLP)
    # classification head
    p["hw"] = uinit(ks[13], (HID, OUT_D), HID)
    p["hb"] = uinit(ks[14], (1, OUT_D), HID)
    return p


# ------------------------ pack params for the kernel -------------------------
def pack_kernel_params(p, ips):
    """Build one f32 (rows, 128) constant slab + the bf16 matmul weights.

    ips = images handled per grid step.  The fused QKV weight emits
    [q*mask_h0 | q*mask_h1 | k | v] with the 1/sqrt(DH) scale folded into q.
    """
    f32, bf16 = jnp.float32, jnp.bfloat16
    R = ips * T_PAD
    scale = 1.0 / np.sqrt(DH)

    def block_diag(w_heads):                      # (N_HEADS, DH, DH) -> (HID, HID)
        rows = []
        for h in range(N_HEADS):
            cols = [w_heads[h] if g == h else jnp.zeros((DH, DH), f32)
                    for g in range(N_HEADS)]
            rows.append(jnp.concatenate(cols, axis=1))
        return jnp.concatenate(rows, axis=0)

    # head-lane masks, (1, HID) each
    lane = np.arange(HID)
    masks = [jnp.asarray(((lane // DH) == h).astype(np.float32))[None, :]
             for h in range(N_HEADS)]

    wqkv, bqkv = [], []
    for b in range(N_BLOCKS):
        wq = block_diag(p["qw"][b]) * scale
        wk = block_diag(p["kw"][b])
        wv = block_diag(p["vw"][b])
        bq = p["qb"][b].reshape(1, HID) * scale
        bk = p["kb"][b].reshape(1, HID)
        bv = p["vb"][b].reshape(1, HID)
        wqkv.append(jnp.concatenate([wq * masks[0], wq * masks[1], wk, wv], axis=1))
        bqkv.append(jnp.concatenate([bq * masks[0], bq * masks[1], bk, bv], axis=1))

    def pad128(a):
        a = jnp.asarray(a, f32)
        return jnp.pad(a, ((0, 0), (0, 128 - a.shape[1])))

    # additive token slab: patch rows get lin_b + pos[1:], cls row gets
    # cls + pos[0], pad rows stay zero  (x = patches_pad @ lin_w + tok_add).
    tok_img = jnp.zeros((T_PAD, HID), f32)
    tok_img = tok_img.at[:NP2].set(p["lin_b"] + p["pos"][1:T])
    tok_img = tok_img.at[NP2:NP2 + 1].set(p["cls"] + p["pos"][0:1])
    tok_add = jnp.tile(tok_img, (ips, 1))                           # (R, HID)

    # attention bias for the head-stacked scores (2R, R): a key column is
    # valid iff same image and a real (non-pad) token; invalid -> -1e30.
    q_tok = np.arange(R)
    k_tok = np.arange(R)
    valid = ((q_tok[:, None] // T_PAD) == (k_tok[None, :] // T_PAD)) & \
            ((k_tok[None, :] % T_PAD) < T)
    bias_half = np.where(valid, 0.0, NEG).astype(np.float32)
    bias = jnp.asarray(np.concatenate([bias_half] * N_HEADS, axis=0))  # (2R, R)

    # misc 8-row chunk: [head mask 0, head mask 1, padded head bias, 0...]
    hb = jnp.full((1, OUT_PAD), NEG, f32).at[:, :OUT_D].set(p["hb"])
    misc = jnp.zeros((8, 128), f32)
    misc = misc.at[0, :HID].set(masks[0][0])
    misc = misc.at[1, :HID].set(masks[1][0])
    misc = misc.at[2, :].set(hb[0])

    chunks = [pad128(tok_add), pad128(bias), misc]
    for b in range(N_BLOCKS):
        blk = jnp.zeros((8, 128), f32)
        blk = blk.at[0, :HID].set(p["n1g"][b, 0])
        blk = blk.at[1, :HID].set(p["n1b"][b, 0])
        blk = blk.at[2, :HID].set(p["n2g"][b, 0])
        blk = blk.at[3, :HID].set(p["n2b"][b, 0])
        blk = blk.at[4, :QKV_W].set(bqkv[b][0])
        blk = blk.at[5, :HID_MLP].set(p["m1b"][b, 0])
        blk = blk.at[6, :HID].set(p["m2b"][b, 0])
        chunks.append(blk)
    const = jnp.concatenate(chunks, axis=0)          # (3R + 8 + 8*N_BLOCKS, 128)

    hw = jnp.zeros((HID, OUT_PAD), f32).at[:, :OUT_D].set(p["hw"])
    weights = [p["lin_w"].astype(bf16),              # (64, 32)
               jnp.stack(wqkv).astype(bf16),         # (NB, 32, 128)
               p["m1w"].astype(bf16),                # (NB, 32, 128)
               p["m2w"].astype(bf16),                # (NB, 128, 32)
               hw.astype(bf16)]                      # (32, 128)
    return const, weights


# ------------------------------- Pallas kernel -------------------------------
def vit_kernel(patches_ref, const_ref, lin_w_ref, wqkv_ref, m1w_ref, m2w_ref,
               hw_ref, out_ref, *, n_img):
    f32, bf16 = jnp.float32, jnp.bfloat16
    R = n_img * T_PAD                       # token rows handled by this step

    # static row offsets into the packed constant slab
    r_tok, r_bias, r_misc = 0, R, 3 * R
    r_blk0 = r_misc + 8

    tok_add = const_ref[r_tok:r_tok + R, :HID]                 # (R, 32)
    bias    = const_ref[r_bias:r_bias + 2 * R, :R]             # (2R, R)
    m0      = const_ref[r_misc:r_misc + 1, :HID]               # (1, 32)
    m1      = const_ref[r_misc + 1:r_misc + 2, :HID]
    hb      = const_ref[r_misc + 2:r_misc + 3, :]              # (1, 128)

    def layernorm(v, g, b):
        mu = jnp.mean(v, axis=-1, keepdims=True)
        var = jnp.mean((v - mu) ** 2, axis=-1, keepdims=True)
        return (v - mu) * jax.lax.rsqrt(var + EPS) * g + b

    # ---- token assembly: patch embedding + (lin_b+pos / cls+pos[0]) slab ----
    x = jnp.dot(patches_ref[...].astype(bf16), lin_w_ref[...],
                preferred_element_type=f32) + tok_add           # (R, 32)

    for blk in range(N_BLOCKS):
        base = r_blk0 + 8 * blk
        n1g  = const_ref[base + 0:base + 1, :HID]
        n1b  = const_ref[base + 1:base + 2, :HID]
        n2g  = const_ref[base + 2:base + 3, :HID]
        n2b  = const_ref[base + 3:base + 4, :HID]
        bqkv = const_ref[base + 4:base + 5, :QKV_W]
        m1b  = const_ref[base + 5:base + 6, :HID_MLP]
        m2b  = const_ref[base + 6:base + 7, :HID]

        # ------- multi-head self-attention: 2 MXU calls for all heads -------
        h1 = layernorm(x, n1g, n1b)
        qkv = jnp.dot(h1.astype(bf16), wqkv_ref[blk],
                      preferred_element_type=f32) + bqkv         # (R, 128)
        # fused lanes: [q*mask_h0 | q*mask_h1 | k | v], q pre-scaled 1/sqrt(DH)
        q_stack = jnp.concatenate([qkv[:, 0:HID], qkv[:, HID:2 * HID]],
                                  axis=0).astype(bf16)           # (2R, 32)
        k = qkv[:, 2 * HID:3 * HID].astype(bf16)                 # (R, 32)
        v = qkv[:, 3 * HID:4 * HID].astype(bf16)                 # (R, 32)

        # scores[h*R + r, c] = q_h(r) . k_h(c); pad / cross-image keys -> -1e30
        scores = jax.lax.dot_general(q_stack, k, (((1,), (1,)), ((), ())),
                                     preferred_element_type=f32) + bias  # (2R,R)
        mx = jnp.max(scores, axis=-1, keepdims=True)
        e = jnp.exp(scores - mx)
        prob = (e * pl.reciprocal(jnp.sum(e, axis=-1, keepdims=True),
                                  approx=True)).astype(bf16)
        o = jnp.dot(prob, v, preferred_element_type=f32)         # (2R, 32)
        # torch.hstack over heads == head-masked sum of the two row halves
        x = x + o[0:R] * m0 + o[R:2 * R] * m1                    # residual

        # ------------------- MLP: Linear -> GELU -> Linear -------------------
        h2 = layernorm(x, n2g, n2b)
        m = jnp.dot(h2.astype(bf16), m1w_ref[blk],
                    preferred_element_type=f32) + m1b            # (R, 128)
        # TODO(synk): nn.GELU default is exact erf; tanh-approx GELU (EUP) used.
        m = jax.nn.gelu(m, approximate=True)
        m = jnp.dot(m.astype(bf16), m2w_ref[blk],
                    preferred_element_type=f32) + m2b            # (R, 32)
        x = x + m                                                # residual

    # ---- classification head on every row (cls rows picked in the wrapper) --
    logits = jnp.dot(x.astype(bf16), hw_ref[...],
                     preferred_element_type=f32) + hb            # (R, 128)
    mx = jnp.max(logits, axis=-1, keepdims=True)
    e = jnp.exp(logits - mx)                 # padded lanes (-1e30 bias) -> 0
    out_ref[...] = e / jnp.sum(e, axis=-1, keepdims=True)


# ---------------------------------- wrapper ----------------------------------
def _default_grid_splits(n_img):
    """v7x has 2 TensorCores per chip -> split the batch across them; keep a
    single grid step on single-TC generations (v5e/v6e)."""
    try:
        kind = jax.devices()[0].device_kind.lower()
    except Exception:
        return 1
    if ("v7" in kind or "7x" in kind) and n_img % 2 == 0:
        return 2
    return 1


def vit_forward_pallas(img, params, *, grid_splits=None):
    n = img.shape[0]
    if grid_splits is None:
        grid_splits = _default_grid_splits(n)
    if grid_splits < 1 or n % grid_splits != 0:
        grid_splits = 1
    ips = n // grid_splits                    # images per grid step
    R = ips * T_PAD

    patches = image_to_patch(img, N_PATCH)                            # (n,16,64)
    patches_pad = jnp.pad(patches, ((0, 0), (0, T_PAD - NP2), (0, 0)))
    patches_pad = patches_pad.reshape(n * T_PAD, INPUT_D)             # (n*24,64)

    const, weights = pack_kernel_params(params, ips)

    def full_spec(arr):
        nd = arr.ndim
        return pl.BlockSpec(arr.shape, lambda i, _nd=nd: (0,) * _nd)

    kernel = functools.partial(vit_kernel, n_img=ips)
    out = pl.pallas_call(
        kernel,
        out_shape=jax.ShapeDtypeStruct((n * T_PAD, OUT_PAD), jnp.float32),
        grid=(grid_splits,),
        in_specs=[pl.BlockSpec((R, INPUT_D), lambda i: (i, 0)),
                  full_spec(const)] + [full_spec(w) for w in weights],
        out_specs=pl.BlockSpec((R, OUT_PAD), lambda i: (i, 0)),
        compiler_params=pltpu.CompilerParams(
            dimension_semantics=("parallel",)),
    )(patches_pad, const, *weights)

    out = out.reshape(n, T_PAD, OUT_PAD)
    return out[:, NP2, :OUT_D]               # per-image cls row, real classes


# --------------------------- pure-JAX reference ------------------------------
def vit_forward_ref(img, p):
    patches = image_to_patch(img, N_PATCH)

    def layernorm(v, g, b):
        mu = jnp.mean(v, -1, keepdims=True)
        var = jnp.mean((v - mu) ** 2, -1, keepdims=True)
        return (v - mu) / jnp.sqrt(var + EPS) * g + b

    def one(pt):
        tok = pt @ p["lin_w"] + p["lin_b"]
        x = jnp.concatenate([p["cls"], tok], 0) + p["pos"]
        for blk in range(N_BLOCKS):
            h1 = layernorm(x, p["n1g"][blk], p["n1b"][blk])
            heads = []
            for hd in range(N_HEADS):
                seq = h1[:, hd * DH:(hd + 1) * DH]
                q = seq @ p["qw"][blk, hd] + p["qb"][blk, hd]
                k = seq @ p["kw"][blk, hd] + p["kb"][blk, hd]
                v = seq @ p["vw"][blk, hd] + p["vb"][blk, hd]
                att = jax.nn.softmax(q @ k.T / DH ** 0.5, -1)
                heads.append(att @ v)
            x = x + jnp.concatenate(heads, 1)
            h2 = layernorm(x, p["n2g"][blk], p["n2b"][blk])
            m = h2 @ p["m1w"][blk] + p["m1b"][blk]
            m = jax.nn.gelu(m, approximate=False)
            m = m @ p["m2w"][blk] + p["m2b"][blk]
            x = x + m
        logits = x[0:1] @ p["hw"] + p["hb"]
        return jax.nn.softmax(logits, -1)[0]

    return jax.vmap(one)(patches)


# ----------------------------------- main ------------------------------------
if __name__ == "__main__":
    key = jax.random.PRNGKey(0)
    k_img, k_par = jax.random.split(key)
    img = jax.random.uniform(k_img, (N_IMG, C, H, W), jnp.float32)
    params = init_params(k_par)

    out = jax.jit(vit_forward_pallas)(img, params)
    out = jax.block_until_ready(out)

    ref = jax.block_until_ready(vit_forward_ref(img, params))

    assert out.shape == (N_IMG, OUT_D), out.shape
    err = np.max(np.abs(np.asarray(out) - np.asarray(ref)))
    assert np.allclose(np.asarray(out), np.asarray(ref), atol=2e-2, rtol=2e-2), err
    # each row is a softmax distribution
    assert np.allclose(np.asarray(out).sum(-1), 1.0, atol=1e-4)

    print("KERNEL_OK")
</pallas_src>

<mosaic_0001>
module attributes {stable_mosaic.version = 11 : i64} {
  func.func @vit_kernel(%arg0: i32, %arg1: memref<48x64xf32, #tpu.memory_space<vmem>>, %arg2: memref<168x128xf32, #tpu.memory_space<vmem>>, %arg3: memref<64x32xbf16, #tpu.memory_space<vmem>>, %arg4: memref<2x32x128xbf16, #tpu.memory_space<vmem>>, %arg5: memref<2x32x128xbf16, #tpu.memory_space<vmem>>, %arg6: memref<2x128x32xbf16, #tpu.memory_space<vmem>>, %arg7: memref<32x128xbf16, #tpu.memory_space<vmem>>, %arg8: memref<48x128xf32, #tpu.memory_space<vmem>>) attributes {dimension_semantics = [#tpu.dimension_semantics<parallel>], iteration_bounds = array<i64: 1>, scalar_prefetch = 0 : i64, scratch_operands = 0 : i64, tpu.core_type = #tpu.core_type<tc>, window_params = [{transform_indices = @transform_0, window_bounds = array<i64: 48, 64>}, {pipeline_mode = #tpu.pipeline_mode<synchronous>, transform_indices = @transform_1, window_bounds = array<i64: 168, 128>}, {pipeline_mode = #tpu.pipeline_mode<synchronous>, transform_indices = @transform_2, window_bounds = array<i64: 64, 32>}, {pipeline_mode = #tpu.pipeline_mode<synchronous>, transform_indices = @transform_3, window_bounds = array<i64: 2, 32, 128>}, {pipeline_mode = #tpu.pipeline_mode<synchronous>, transform_indices = @transform_4, window_bounds = array<i64: 2, 32, 128>}, {pipeline_mode = #tpu.pipeline_mode<synchronous>, transform_indices = @transform_5, window_bounds = array<i64: 2, 128, 32>}, {pipeline_mode = #tpu.pipeline_mode<synchronous>, transform_indices = @transform_6, window_bounds = array<i64: 32, 128>}, {transform_indices = @transform_7, window_bounds = array<i64: 48, 128>}]} {
    %c0 = arith.constant 0 : index
    %c0_0 = arith.constant 0 : index
    %0 = vector.load %arg2[%c0, %c0_0] : memref<168x128xf32, #tpu.memory_space<vmem>>, vector<48x32xf32>
    %c48 = arith.constant 48 : index
    %c0_1 = arith.constant 0 : index
    %1 = vector.load %arg2[%c48, %c0_1] : memref<168x128xf32, #tpu.memory_space<vmem>>, vector<96x48xf32>
    %c144 = arith.constant 144 : index
    %c0_2 = arith.constant 0 : index
    %2 = vector.load %arg2[%c144, %c0_2] : memref<168x128xf32, #tpu.memory_space<vmem>>, vector<1x32xf32>
    %c145 = arith.constant 145 : index
    %c0_3 = arith.constant 0 : index
    %3 = vector.load %arg2[%c145, %c0_3] : memref<168x128xf32, #tpu.memory_space<vmem>>, vector<1x32xf32>
    %c146 = arith.constant 146 : index
    %c0_4 = arith.constant 0 : index
    %4 = vector.load %arg2[%c146, %c0_4] : memref<168x128xf32, #tpu.memory_space<vmem>>, vector<1x128xf32>
    %c0_5 = arith.constant 0 : index
    %c0_6 = arith.constant 0 : index
    %5 = vector.load %arg1[%c0_5, %c0_6] : memref<48x64xf32, #tpu.memory_space<vmem>>, vector<48x64xf32>
    %6 = arith.truncf %5 : vector<48x64xf32> to vector<48x64xbf16>
    %c0_7 = arith.constant 0 : index
    %c0_8 = arith.constant 0 : index
    %7 = vector.load %arg3[%c0_7, %c0_8] : memref<64x32xbf16, #tpu.memory_space<vmem>>, vector<64x32xbf16>
    %cst = arith.constant dense<0.000000e+00> : vector<48x32xf32>
    %8 = tpu.matmul %6, %7, %cst {dimension_numbers = #tpu.dot_dimension_numbers<[1], [0], [0], [1], [0, 0, 1, 1], [], []>} : vector<48x64xbf16>, vector<64x32xbf16>, vector<48x32xf32> -> vector<48x32xf32>
    %9 = arith.addf %8, %0 : vector<48x32xf32>
    %c152 = arith.constant 152 : index
    %c0_9 = arith.constant 0 : index
    %10 = vector.load %arg2[%c152, %c0_9] : memref<168x128xf32, #tpu.memory_space<vmem>>, vector<1x32xf32>
    %c153 = arith.constant 153 : index
    %c0_10 = arith.constant 0 : index
    %11 = vector.load %arg2[%c153, %c0_10] : memref<168x128xf32, #tpu.memory_space<vmem>>, vector<1x32xf32>
    %c154 = arith.constant 154 : index
    %c0_11 = arith.constant 0 : index
    %12 = vector.load %arg2[%c154, %c0_11] : memref<168x128xf32, #tpu.memory_space<vmem>>, vector<1x32xf32>
    %c155 = arith.constant 155 : index
    %c0_12 = arith.constant 0 : index
    %13 = vector.load %arg2[%c155, %c0_12] : memref<168x128xf32, #tpu.memory_space<vmem>>, vector<1x32xf32>
    %c156 = arith.constant 156 : index
    %c0_13 = arith.constant 0 : index
    %14 = vector.load %arg2[%c156, %c0_13] : memref<168x128xf32, #tpu.memory_space<vmem>>, vector<1x128xf32>
    %c157 = arith.constant 157 : index
    %c0_14 = arith.constant 0 : index
    %15 = vector.load %arg2[%c157, %c0_14] : memref<168x128xf32, #tpu.memory_space<vmem>>, vector<1x128xf32>
    %c158 = arith.constant 158 : index
    %c0_15 = arith.constant 0 : index
    %16 = vector.load %arg2[%c158, %c0_15] : memref<168x128xf32, #tpu.memory_space<vmem>>, vector<1x32xf32>
    %cst_16 = arith.constant dense<0.000000e+00> : vector<48xf32>
    %17 = vector.multi_reduction <add>, %9, %cst_16 [1] : vector<48x32xf32> to vector<48xf32>
    %18 = vector.shape_cast %17 : vector<48xf32> to vector<48x1xf32>
    %cst_17 = arith.constant 3.200000e+01 : f32
    %19 = vector.broadcast %cst_17 : f32 to vector<48x1xf32>
    %20 = arith.divf %18, %19 : vector<48x1xf32>
    %21 = vector.broadcast %20 : vector<48x1xf32> to vector<48x32xf32>
    %22 = arith.subf %9, %21 : vector<48x32xf32>
    %23 = arith.mulf %22, %22 : vector<48x32xf32>
    %cst_18 = arith.constant dense<0.000000e+00> : vector<48xf32>
    %24 = vector.multi_reduction <add>, %23, %cst_18 [1] : vector<48x32xf32> to vector<48xf32>
    %25 = vector.shape_cast %24 : vector<48xf32> to vector<48x1xf32>
    %cst_19 = arith.constant 3.200000e+01 : f32
    %26 = vector.broadcast %cst_19 : f32 to vector<48x1xf32>
    %27 = arith.divf %25, %26 : vector<48x1xf32>
    %28 = vector.broadcast %20 : vector<48x1xf32> to vector<48x32xf32>
    %29 = arith.subf %9, %28 : vector<48x32xf32>
    %cst_20 = arith.constant 9.99999974E-6 : f32
    %30 = vector.broadcast %cst_20 : f32 to vector<48x1xf32>
    %31 = arith.addf %27, %30 : vector<48x1xf32>
    %32 = math.rsqrt %31 : vector<48x1xf32>
    %33 = vector.broadcast %32 : vector<48x1xf32> to vector<48x32xf32>
    %34 = arith.mulf %29, %33 : vector<48x32xf32>
    %35 = vector.broadcast %10 : vector<1x32xf32> to vector<48x32xf32>
    %36 = arith.mulf %34, %35 : vector<48x32xf32>
    %37 = vector.broadcast %11 : vector<1x32xf32> to vector<48x32xf32>
    %38 = arith.addf %36, %37 : vector<48x32xf32>
    %39 = arith.truncf %38 : vector<48x32xf32> to vector<48x32xbf16>
    %c0_21 = arith.constant 0 : index
    %c0_22 = arith.constant 0 : index
    %c0_23 = arith.constant 0 : index
    %40 = vector.load %arg4[%c0_21, %c0_22, %c0_23] : memref<2x32x128xbf16, #tpu.memory_space<vmem>>, vector<1x32x128xbf16>
    %41 = vector.shape_cast %40 : vector<1x32x128xbf16> to vector<32x128xbf16>
    %cst_24 = arith.constant dense<0.000000e+00> : vector<48x128xf32>
    %42 = tpu.matmul %39, %41, %cst_24 {dimension_numbers = #tpu.dot_dimension_numbers<[1], [0], [0], [1], [0, 0, 1, 1], [], []>} : vector<48x32xbf16>, vector<32x128xbf16>, vector<48x128xf32> -> vector<48x128xf32>
    %43 = vector.broadcast %14 : vector<1x128xf32> to vector<48x128xf32>
    %44 = arith.addf %42, %43 : vector<48x128xf32>
    %45 = vector.extract_strided_slice %44 {offsets = [0, 0], sizes = [48, 32], strides = [1, 1]} : vector<48x128xf32> to vector<48x32xf32>
    %46 = vector.extract_strided_slice %44 {offsets = [0, 32], sizes = [48, 32], strides = [1, 1]} : vector<48x128xf32> to vector<48x32xf32>
    %47 = tpu.concatenate %45, %46 in 0 : vector<48x32xf32>, vector<48x32xf32> -> vector<96x32xf32>
    %48 = arith.truncf %47 : vector<96x32xf32> to vector<96x32xbf16>
    %49 = vector.extract_strided_slice %44 {offsets = [0, 64], sizes = [48, 32], strides = [1, 1]} : vector<48x128xf32> to vector<48x32xf32>
    %50 = arith.truncf %49 : vector<48x32xf32> to vector<48x32xbf16>
    %51 = vector.extract_strided_slice %44 {offsets = [0, 96], sizes = [48, 32], strides = [1, 1]} : vector<48x128xf32> to vector<48x32xf32>
    %52 = arith.truncf %51 : vector<48x32xf32> to vector<48x32xbf16>
    %cst_25 = arith.constant dense<0.000000e+00> : vector<96x48xf32>
    %53 = tpu.matmul %48, %50, %cst_25 {dimension_numbers = #tpu.dot_dimension_numbers<[1], [1], [0], [0], [0, 0, 1, 0], [], []>} : vector<96x32xbf16>, vector<48x32xbf16>, vector<96x48xf32> -> vector<96x48xf32>
    %54 = arith.addf %53, %1 : vector<96x48xf32>
    %cst_26 = arith.constant dense<0xFF800000> : vector<96xf32>
    %55 = vector.multi_reduction <maximumf>, %54, %cst_26 [1] : vector<96x48xf32> to vector<96xf32>
    %56 = vector.shape_cast %55 : vector<96xf32> to vector<96x1xf32>
    %57 = vector.broadcast %56 : vector<96x1xf32> to vector<96x48xf32>
    %58 = arith.subf %54, %57 : vector<96x48xf32>
    %59 = math.exp %58 : vector<96x48xf32>
    %cst_27 = arith.constant dense<0.000000e+00> : vector<96xf32>
    %60 = vector.multi_reduction <add>, %59, %cst_27 [1] : vector<96x48xf32> to vector<96xf32>
    %61 = vector.shape_cast %60 : vector<96xf32> to vector<96x1xf32>
    %62 = tpu.reciprocal %61 {approx = true} : vector<96x1xf32> -> vector<96x1xf32>
    %63 = vector.broadcast %62 : vector<96x1xf32> to vector<96x48xf32>
    %64 = arith.mulf %59, %63 : vector<96x48xf32>
    %65 = arith.truncf %64 : vector<96x48xf32> to vector<96x48xbf16>
    %cst_28 = arith.constant dense<0.000000e+00> : vector<96x32xf32>
    %66 = tpu.matmul %65, %52, %cst_28 {dimension_numbers = #tpu.dot_dimension_numbers<[1], [0], [0], [1], [0, 0, 1, 1], [], []>} : vector<96x48xbf16>, vector<48x32xbf16>, vector<96x32xf32> -> vector<96x32xf32>
    %67 = vector.extract_strided_slice %66 {offsets = [0, 0], sizes = [48, 32], strides = [1, 1]} : vector<96x32xf32> to vector<48x32xf32>
    %68 = vector.broadcast %2 : vector<1x32xf32> to vector<48x32xf32>
    %69 = arith.mulf %67, %68 : vector<48x32xf32>
    %70 = arith.addf %9, %69 : vector<48x32xf32>
    %71 = vector.extract_strided_slice %66 {offsets = [48, 0], sizes = [48, 32], strides = [1, 1]} : vector<96x32xf32> to vector<48x32xf32>
    %72 = vector.broadcast %3 : vector<1x32xf32> to vector<48x32xf32>
    %73 = arith.mulf %71, %72 : vector<48x32xf32>
    %74 = arith.addf %70, %73 : vector<48x32xf32>
    %cst_29 = arith.constant dense<0.000000e+00> : vector<48xf32>
    %75 = vector.multi_reduction <add>, %74, %cst_29 [1] : vector<48x32xf32> to vector<48xf32>
    %76 = vector.shape_cast %75 : vector<48xf32> to vector<48x1xf32>
    %cst_30 = arith.constant 3.200000e+01 : f32
    %77 = vector.broadcast %cst_30 : f32 to vector<48x1xf32>
    %78 = arith.divf %76, %77 : vector<48x1xf32>
    %79 = vector.broadcast %78 : vector<48x1xf32> to vector<48x32xf32>
    %80 = arith.subf %74, %79 : vector<48x32xf32>
    %81 = arith.mulf %80, %80 : vector<48x32xf32>
    %cst_31 = arith.constant dense<0.000000e+00> : vector<48xf32>
    %82 = vector.multi_reduction <add>, %81, %cst_31 [1] : vector<48x32xf32> to vector<48xf32>
    %83 = vector.shape_cast %82 : vector<48xf32> to vector<48x1xf32>
    %cst_32 = arith.constant 3.200000e+01 : f32
    %84 = vector.broadcast %cst_32 : f32 to vector<48x1xf32>
    %85 = arith.divf %83, %84 : vector<48x1xf32>
    %86 = vector.broadcast %78 : vector<48x1xf32> to vector<48x32xf32>
    %87 = arith.subf %74, %86 : vector<48x32xf32>
    %cst_33 = arith.constant 9.99999974E-6 : f32
    %88 = vector.broadcast %cst_33 : f32 to vector<48x1xf32>
    %89 = arith.addf %85, %88 : vector<48x1xf32>
    %90 = math.rsqrt %89 : vector<48x1xf32>
    %91 = vector.broadcast %90 : vector<48x1xf32> to vector<48x32xf32>
    %92 = arith.mulf %87, %91 : vector<48x32xf32>
    %93 = vector.broadcast %12 : vector<1x32xf32> to vector<48x32xf32>
    %94 = arith.mulf %92, %93 : vector<48x32xf32>
    %95 = vector.broadcast %13 : vector<1x32xf32> to vector<48x32xf32>
    %96 = arith.addf %94, %95 : vector<48x32xf32>
    %97 = arith.truncf %96 : vector<48x32xf32> to vector<48x32xbf16>
    %c0_34 = arith.constant 0 : index
    %c0_35 = arith.constant 0 : index
    %c0_36 = arith.constant 0 : index
    %98 = vector.load %arg5[%c0_34, %c0_35, %c0_36] : memref<2x32x128xbf16, #tpu.memory_space<vmem>>, vector<1x32x128xbf16>
    %99 = vector.shape_cast %98 : vector<1x32x128xbf16> to vector<32x128xbf16>
    %cst_37 = arith.constant dense<0.000000e+00> : vector<48x128xf32>
    %100 = tpu.matmul %97, %99, %cst_37 {dimension_numbers = #tpu.dot_dimension_numbers<[1], [0], [0], [1], [0, 0, 1, 1], [], []>} : vector<48x32xbf16>, vector<32x128xbf16>, vector<48x128xf32> -> vector<48x128xf32>
    %101 = vector.broadcast %15 : vector<1x128xf32> to vector<48x128xf32>
    %102 = arith.addf %100, %101 : vector<48x128xf32>
    %103 = arith.mulf %102, %102 : vector<48x128xf32>
    %104 = arith.mulf %102, %103 : vector<48x128xf32>
    %cst_38 = arith.constant 4.471500e-02 : f32
    %105 = vector.broadcast %cst_38 : f32 to vector<48x128xf32>
    %106 = arith.mulf %105, %104 : vector<48x128xf32>
    %107 = arith.addf %102, %106 : vector<48x128xf32>
    %cst_39 = arith.constant 0.797884583 : f32
    %108 = vector.broadcast %cst_39 : f32 to vector<48x128xf32>
    %109 = arith.mulf %108, %107 : vector<48x128xf32>
    %110 = math.tanh %109 : vector<48x128xf32>
    %cst_40 = arith.constant 1.000000e+00 : f32
    %111 = vector.broadcast %cst_40 : f32 to vector<48x128xf32>
    %112 = arith.addf %111, %110 : vector<48x128xf32>
    %cst_41 = arith.constant 5.000000e-01 : f32
    %113 = vector.broadcast %cst_41 : f32 to vector<48x128xf32>
    %114 = arith.mulf %113, %112 : vector<48x128xf32>
    %115 = arith.mulf %102, %114 : vector<48x128xf32>
    %116 = arith.truncf %115 : vector<48x128xf32> to vector<48x128xbf16>
    %c0_42 = arith.constant 0 : index
    %c0_43 = arith.constant 0 : index
    %c0_44 = arith.constant 0 : index
    %117 = vector.load %arg6[%c0_42, %c0_43, %c0_44] : memref<2x128x32xbf16, #tpu.memory_space<vmem>>, vector<1x128x32xbf16>
    %118 = vector.shape_cast %117 : vector<1x128x32xbf16> to vector<128x32xbf16>
    %cst_45 = arith.constant dense<0.000000e+00> : vector<48x32xf32>
    %119 = tpu.matmul %116, %118, %cst_45 {dimension_numbers = #tpu.dot_dimension_numbers<[1], [0], [0], [1], [0, 0, 1, 1], [], []>} : vector<48x128xbf16>, vector<128x32xbf16>, vector<48x32xf32> -> vector<48x32xf32>
    %120 = vector.broadcast %16 : vector<1x32xf32> to vector<48x32xf32>
    %121 = arith.addf %119, %120 : vector<48x32xf32>
    %122 = arith.addf %74, %121 : vector<48x32xf32>
    %c160 = arith.constant 160 : index
    %c0_46 = arith.constant 0 : index
    %123 = vector.load %arg2[%c160, %c0_46] : memref<168x128xf32, #tpu.memory_space<vmem>>, vector<1x32xf32>
    %c161 = arith.constant 161 : index
    %c0_47 = arith.constant 0 : index
    %124 = vector.load %arg2[%c161, %c0_47] : memref<168x128xf32, #tpu.memory_space<vmem>>, vector<1x32xf32>
    %c162 = arith.constant 162 : index
    %c0_48 = arith.constant 0 : index
    %125 = vector.load %arg2[%c162, %c0_48] : memref<168x128xf32, #tpu.memory_space<vmem>>, vector<1x32xf32>
    %c163 = arith.constant 163 : index
    %c0_49 = arith.constant 0 : index
    %126 = vector.load %arg2[%c163, %c0_49] : memref<168x128xf32, #tpu.memory_space<vmem>>, vector<1x32xf32>
    %c164 = arith.constant 164 : index
    %c0_50 = arith.constant 0 : index
    %127 = vector.load %arg2[%c164, %c0_50] : memref<168x128xf32, #tpu.memory_space<vmem>>, vector<1x128xf32>
    %c165 = arith.constant 165 : index
    %c0_51 = arith.constant 0 : index
    %128 = vector.load %arg2[%c165, %c0_51] : memref<168x128xf32, #tpu.memory_space<vmem>>, vector<1x128xf32>
    %c166 = arith.constant 166 : index
    %c0_52 = arith.constant 0 : index
    %129 = vector.load %arg2[%c166, %c0_52] : memref<168x128xf32, #tpu.memory_space<vmem>>, vector<1x32xf32>
    %cst_53 = arith.constant dense<0.000000e+00> : vector<48xf32>
    %130 = vector.multi_reduction <add>, %122, %cst_53 [1] : vector<48x32xf32> to vector<48xf32>
    %131 = vector.shape_cast %130 : vector<48xf32> to vector<48x1xf32>
    %cst_54 = arith.constant 3.200000e+01 : f32
    %132 = vector.broadcast %cst_54 : f32 to vector<48x1xf32>
    %133 = arith.divf %131, %132 : vector<48x1xf32>
    %134 = vector.broadcast %133 : vector<48x1xf32> to vector<48x32xf32>
    %135 = arith.subf %122, %134 : vector<48x32xf32>
    %136 = arith.mulf %135, %135 : vector<48x32xf32>
    %cst_55 = arith.constant dense<0.000000e+00> : vector<48xf32>
    %137 = vector.multi_reduction <add>, %136, %cst_55 [1] : vector<48x32xf32> to vector<48xf32>
    %138 = vector.shape_cast %137 : vector<48xf32> to vector<48x1xf32>
    %cst_56 = arith.constant 3.200000e+01 : f32
    %139 = vector.broadcast %cst_56 : f32 to vector<48x1xf32>
    %140 = arith.divf %138, %139 : vector<48x1xf32>
    %141 = vector.broadcast %133 : vector<48x1xf32> to vector<48x32xf32>
    %142 = arith.subf %122, %141 : vector<48x32xf32>
    %cst_57 = arith.constant 9.99999974E-6 : f32
    %143 = vector.broadcast %cst_57 : f32 to vector<48x1xf32>
    %144 = arith.addf %140, %143 : vector<48x1xf32>
    %145 = math.rsqrt %144 : vector<48x1xf32>
    %146 = vector.broadcast %145 : vector<48x1xf32> to vector<48x32xf32>
    %147 = arith.mulf %142, %146 : vector<48x32xf32>
    %148 = vector.broadcast %123 : vector<1x32xf32> to vector<48x32xf32>
    %149 = arith.mulf %147, %148 : vector<48x32xf32>
    %150 = vector.broadcast %124 : vector<1x32xf32> to vector<48x32xf32>
    %151 = arith.addf %149, %150 : vector<48x32xf32>
    %152 = arith.truncf %151 : vector<48x32xf32> to vector<48x32xbf16>
    %c1 = arith.constant 1 : index
    %c0_58 = arith.constant 0 : index
    %c0_59 = arith.constant 0 : index
    %153 = vector.load %arg4[%c1, %c0_58, %c0_59] : memref<2x32x128xbf16, #tpu.memory_space<vmem>>, vector<1x32x128xbf16>
    %154 = vector.shape_cast %153 : vector<1x32x128xbf16> to vector<32x128xbf16>
    %cst_60 = arith.constant dense<0.000000e+00> : vector<48x128xf32>
    %155 = tpu.matmul %152, %154, %cst_60 {dimension_numbers = #tpu.dot_dimension_numbers<[1], [0], [0], [1], [0, 0, 1, 1], [], []>} : vector<48x32xbf16>, vector<32x128xbf16>, vector<48x128xf32> -> vector<48x128xf32>
    %156 = vector.broadcast %127 : vector<1x128xf32> to vector<48x128xf32>
    %157 = arith.addf %155, %156 : vector<48x128xf32>
    %158 = vector.extract_strided_slice %157 {offsets = [0, 0], sizes = [48, 32], strides = [1, 1]} : vector<48x128xf32> to vector<48x32xf32>
    %159 = vector.extract_strided_slice %157 {offsets = [0, 32], sizes = [48, 32], strides = [1, 1]} : vector<48x128xf32> to vector<48x32xf32>
    %160 = tpu.concatenate %158, %159 in 0 : vector<48x32xf32>, vector<48x32xf32> -> vector<96x32xf32>
    %161 = arith.truncf %160 : vector<96x32xf32> to vector<96x32xbf16>
    %162 = vector.extract_strided_slice %157 {offsets = [0, 64], sizes = [48, 32], strides = [1, 1]} : vector<48x128xf32> to vector<48x32xf32>
    %163 = arith.truncf %162 : vector<48x32xf32> to vector<48x32xbf16>
    %164 = vector.extract_strided_slice %157 {offsets = [0, 96], sizes = [48, 32], strides = [1, 1]} : vector<48x128xf32> to vector<48x32xf32>
    %165 = arith.truncf %164 : vector<48x32xf32> to vector<48x32xbf16>
    %cst_61 = arith.constant dense<0.000000e+00> : vector<96x48xf32>
    %166 = tpu.matmul %161, %163, %cst_61 {dimension_numbers = #tpu.dot_dimension_numbers<[1], [1], [0], [0], [0, 0, 1, 0], [], []>} : vector<96x32xbf16>, vector<48x32xbf16>, vector<96x48xf32> -> vector<96x48xf32>
    %167 = arith.addf %166, %1 : vector<96x48xf32>
    %cst_62 = arith.constant dense<0xFF800000> : vector<96xf32>
    %168 = vector.multi_reduction <maximumf>, %167, %cst_62 [1] : vector<96x48xf32> to vector<96xf32>
    %169 = vector.shape_cast %168 : vector<96xf32> to vector<96x1xf32>
    %170 = vector.broadcast %169 : vector<96x1xf32> to vector<96x48xf32>
    %171 = arith.subf %167, %170 : vector<96x48xf32>
    %172 = math.exp %171 : vector<96x48xf32>
    %cst_63 = arith.constant dense<0.000000e+00> : vector<96xf32>
    %173 = vector.multi_reduction <add>, %172, %cst_63 [1] : vector<96x48xf32> to vector<96xf32>
    %174 = vector.shape_cast %173 : vector<96xf32> to vector<96x1xf32>
    %175 = tpu.reciprocal %174 {approx = true} : vector<96x1xf32> -> vector<96x1xf32>
    %176 = vector.broadcast %175 : vector<96x1xf32> to vector<96x48xf32>
    %177 = arith.mulf %172, %176 : vector<96x48xf32>
    %178 = arith.truncf %177 : vector<96x48xf32> to vector<96x48xbf16>
    %cst_64 = arith.constant dense<0.000000e+00> : vector<96x32xf32>
    %179 = tpu.matmul %178, %165, %cst_64 {dimension_numbers = #tpu.dot_dimension_numbers<[1], [0], [0], [1], [0, 0, 1, 1], [], []>} : vector<96x48xbf16>, vector<48x32xbf16>, vector<96x32xf32> -> vector<96x32xf32>
    %180 = vector.extract_strided_slice %179 {offsets = [0, 0], sizes = [48, 32], strides = [1, 1]} : vector<96x32xf32> to vector<48x32xf32>
    %181 = vector.broadcast %2 : vector<1x32xf32> to vector<48x32xf32>
    %182 = arith.mulf %180, %181 : vector<48x32xf32>
    %183 = arith.addf %122, %182 : vector<48x32xf32>
    %184 = vector.extract_strided_slice %179 {offsets = [48, 0], sizes = [48, 32], strides = [1, 1]} : vector<96x32xf32> to vector<48x32xf32>
    %185 = vector.broadcast %3 : vector<1x32xf32> to vector<48x32xf32>
    %186 = arith.mulf %184, %185 : vector<48x32xf32>
    %187 = arith.addf %183, %186 : vector<48x32xf32>
    %cst_65 = arith.constant dense<0.000000e+00> : vector<48xf32>
    %188 = vector.multi_reduction <add>, %187, %cst_65 [1] : vector<48x32xf32> to vector<48xf32>
    %189 = vector.shape_cast %188 : vector<48xf32> to vector<48x1xf32>
    %cst_66 = arith.constant 3.200000e+01 : f32
    %190 = vector.broadcast %cst_66 : f32 to vector<48x1xf32>
    %191 = arith.divf %189, %190 : vector<48x1xf32>
    %192 = vector.broadcast %191 : vector<48x1xf32> to vector<48x32xf32>
    %193 = arith.subf %187, %192 : vector<48x32xf32>
    %194 = arith.mulf %193, %193 : vector<48x32xf32>
    %cst_67 = arith.constant dense<0.000000e+00> : vector<48xf32>
    %195 = vector.multi_reduction <add>, %194, %cst_67 [1] : vector<48x32xf32> to vector<48xf32>
    %196 = vector.shape_cast %195 : vector<48xf32> to vector<48x1xf32>
    %cst_68 = arith.constant 3.200000e+01 : f32
    %197 = vector.broadcast %cst_68 : f32 to vector<48x1xf32>
    %198 = arith.divf %196, %197 : vector<48x1xf32>
    %199 = vector.broadcast %191 : vector<48x1xf32> to vector<48x32xf32>
    %200 = arith.subf %187, %199 : vector<48x32xf32>
    %cst_69 = arith.constant 9.99999974E-6 : f32
    %201 = vector.broadcast %cst_69 : f32 to vector<48x1xf32>
    %202 = arith.addf %198, %201 : vector<48x1xf32>
    %203 = math.rsqrt %202 : vector<48x1xf32>
    %204 = vector.broadcast %203 : vector<48x1xf32> to vector<48x32xf32>
    %205 = arith.mulf %200, %204 : vector<48x32xf32>
    %206 = vector.broadcast %125 : vector<1x32xf32> to vector<48x32xf32>
    %207 = arith.mulf %205, %206 : vector<48x32xf32>
    %208 = vector.broadcast %126 : vector<1x32xf32> to vector<48x32xf32>
    %209 = arith.addf %207, %208 : vector<48x32xf32>
    %210 = arith.truncf %209 : vector<48x32xf32> to vector<48x32xbf16>
    %c1_70 = arith.constant 1 : index
    %c0_71 = arith.constant 0 : index
    %c0_72 = arith.constant 0 : index
    %211 = vector.load %arg5[%c1_70, %c0_71, %c0_72] : memref<2x32x128xbf16, #tpu.memory_space<vmem>>, vector<1x32x128xbf16>
    %212 = vector.shape_cast %211 : vector<1x32x128xbf16> to vector<32x128xbf16>
    %cst_73 = arith.constant dense<0.000000e+00> : vector<48x128xf32>
    %213 = tpu.matmul %210, %212, %cst_73 {dimension_numbers = #tpu.dot_dimension_numbers<[1], [0], [0], [1], [0, 0, 1, 1], [], []>} : vector<48x32xbf16>, vector<32x128xbf16>, vector<48x128xf32> -> vector<48x128xf32>
    %214 = vector.broadcast %128 : vector<1x128xf32> to vector<48x128xf32>
    %215 = arith.addf %213, %214 : vector<48x128xf32>
    %216 = arith.mulf %215, %215 : vector<48x128xf32>
    %217 = arith.mulf %215, %216 : vector<48x128xf32>
    %cst_74 = arith.constant 4.471500e-02 : f32
    %218 = vector.broadcast %cst_74 : f32 to vector<48x128xf32>
    %219 = arith.mulf %218, %217 : vector<48x128xf32>
    %220 = arith.addf %215, %219 : vector<48x128xf32>
    %cst_75 = arith.constant 0.797884583 : f32
    %221 = vector.broadcast %cst_75 : f32 to vector<48x128xf32>
    %222 = arith.mulf %221, %220 : vector<48x128xf32>
    %223 = math.tanh %222 : vector<48x128xf32>
    %cst_76 = arith.constant 1.000000e+00 : f32
    %224 = vector.broadcast %cst_76 : f32 to vector<48x128xf32>
    %225 = arith.addf %224, %223 : vector<48x128xf32>
    %cst_77 = arith.constant 5.000000e-01 : f32
    %226 = vector.broadcast %cst_77 : f32 to vector<48x128xf32>
    %227 = arith.mulf %226, %225 : vector<48x128xf32>
    %228 = arith.mulf %215, %227 : vector<48x128xf32>
    %229 = arith.truncf %228 : vector<48x128xf32> to vector<48x128xbf16>
    %c1_78 = arith.constant 1 : index
    %c0_79 = arith.constant 0 : index
    %c0_80 = arith.constant 0 : index
    %230 = vector.load %arg6[%c1_78, %c0_79, %c0_80] : memref<2x128x32xbf16, #tpu.memory_space<vmem>>, vector<1x128x32xbf16>
    %231 = vector.shape_cast %230 : vector<1x128x32xbf16> to vector<128x32xbf16>
    %cst_81 = arith.constant dense<0.000000e+00> : vector<48x32xf32>
    %232 = tpu.matmul %229, %231, %cst_81 {dimension_numbers = #tpu.dot_dimension_numbers<[1], [0], [0], [1], [0, 0, 1, 1], [], []>} : vector<48x128xbf16>, vector<128x32xbf16>, vector<48x32xf32> -> vector<48x32xf32>
    %233 = vector.broadcast %129 : vector<1x32xf32> to vector<48x32xf32>
    %234 = arith.addf %232, %233 : vector<48x32xf32>
    %235 = arith.addf %187, %234 : vector<48x32xf32>
    %236 = arith.truncf %235 : vector<48x32xf32> to vector<48x32xbf16>
    %c0_82 = arith.constant 0 : index
    %c0_83 = arith.constant 0 : index
    %237 = vector.load %arg7[%c0_82, %c0_83] : memref<32x128xbf16, #tpu.memory_space<vmem>>, vector<32x128xbf16>
    %cst_84 = arith.constant dense<0.000000e+00> : vector<48x128xf32>
    %238 = tpu.matmul %236, %237, %cst_84 {dimension_numbers = #tpu.dot_dimension_numbers<[1], [0], [0], [1], [0, 0, 1, 1], [], []>} : vector<48x32xbf16>, vector<32x128xbf16>, vector<48x128xf32> -> vector<48x128xf32>
    %239 = vector.broadcast %4 : vector<1x128xf32> to vector<48x128xf32>
    %240 = arith.addf %238, %239 : vector<48x128xf32>
    %cst_85 = arith.constant dense<0xFF800000> : vector<48xf32>
    %241 = vector.multi_reduction <maximumf>, %240, %cst_85 [1] : vector<48x128xf32> to vector<48xf32>
    %242 = vector.shape_cast %241 : vector<48xf32> to vector<48x1xf32>
    %243 = vector.broadcast %242 : vector<48x1xf32> to vector<48x128xf32>
    %244 = arith.subf %240, %243 : vector<48x128xf32>
    %245 = math.exp %244 : vector<48x128xf32>
    %cst_86 = arith.constant dense<0.000000e+00> : vector<48xf32>
    %246 = vector.multi_reduction <add>, %245, %cst_86 [1] : vector<48x128xf32> to vector<48xf32>
    %247 = vector.shape_cast %246 : vector<48xf32> to vector<48x1xf32>
    %248 = vector.broadcast %247 : vector<48x1xf32> to vector<48x128xf32>
    %249 = arith.divf %245, %248 : vector<48x128xf32>
    %c0_87 = arith.constant 0 : index
    %c0_88 = arith.constant 0 : index
    %250 = vector.load %arg8[%c0_87, %c0_88] : memref<48x128xf32, #tpu.memory_space<vmem>>, vector<48x128xf32>
    tpu.vector_store %arg8[%c0_87, %c0_88], %249 {strides = array<i32>} : memref<48x128xf32, #tpu.memory_space<vmem>>, vector<48x128xf32>,
    return
  }
  func.func @transform_0(%arg0: i32) -> (i32, i32) {
    %c0_i32 = arith.constant 0 : i32
    %c0_i32_0 = arith.constant 0 : i32
    return %arg0, %c0_i32 : i32, i32
  }
  func.func @transform_1(%arg0: i32) -> (i32, i32) {
    %c0_i32 = arith.constant 0 : i32
    %c0_i32_0 = arith.constant 0 : i32
    %c0_i32_1 = arith.constant 0 : i32
    return %c0_i32, %c0_i32_0 : i32, i32
  }
  func.func @transform_2(%arg0: i32) -> (i32, i32) {
    %c0_i32 = arith.constant 0 : i32
    %c0_i32_0 = arith.constant 0 : i32
    %c0_i32_1 = arith.constant 0 : i32
    return %c0_i32, %c0_i32_0 : i32, i32
  }
  func.func @transform_3(%arg0: i32) -> (i32, i32, i32) {
    %c0_i32 = arith.constant 0 : i32
    %c0_i32_0 = arith.constant 0 : i32
    %c0_i32_1 = arith.constant 0 : i32
    %c0_i32_2 = arith.constant 0 : i32
    return %c0_i32, %c0_i32_0, %c0_i32_1 : i32, i32, i32
  }
  func.func @transform_4(%arg0: i32) -> (i32, i32, i32) {
    %c0_i32 = arith.constant 0 : i32
    %c0_i32_0 = arith.constant 0 : i32
    %c0_i32_1 = arith.constant 0 : i32
    %c0_i32_2 = arith.constant 0 : i32
    return %c0_i32, %c0_i32_0, %c0_i32_1 : i32, i32, i32
  }
  func.func @transform_5(%arg0: i32) -> (i32, i32, i32) {
    %c0_i32 = arith.constant 0 : i32
    %c0_i32_0 = arith.constant 0 : i32
    %c0_i32_1 = arith.constant 0 : i32
    %c0_i32_2 = arith.constant 0 : i32
    return %c0_i32, %c0_i32_0, %c0_i32_1 : i32, i32, i32
  }
  func.func @transform_6(%arg0: i32) -> (i32, i32) {
    %c0_i32 = arith.constant 0 : i32
    %c0_i32_0 = arith.constant 0 : i32
    %c0_i32_1 = arith.constant 0 : i32
    return %c0_i32, %c0_i32_0 : i32, i32
  }
  func.func @transform_7(%arg0: i32) -> (i32, i32) {
    %c0_i32 = arith.constant 0 : i32
    %c0_i32_0 = arith.constant 0 : i32
    return %arg0, %c0_i32 : i32, i32
  }
}

</mosaic_0001>

<llo_original>
// kernel: squeeze.51
$region0: #{squeeze.51}
  %s0 = inlined_call_operand.vmem [shape: f32[2,16], index: 0, kind: input, shape index: {}]
  %s1 = inlined_call_operand.vmem [shape: f32[1,32], index: 1, kind: output, shape index: {}]
  $region1: #{squeeze.51} parent=0
    #allocation0 [shape = 'u8[4096]{0}', space=vmem, size = 0x1000, scoped, tag = 'scoped mem for output reshape']
    #allocation1 [shape = 'u8[4096]{0}', space=vmem, size = 0x1000, scoped, tag = 'scoped mem for input reshape']
    %s3 = sshllo.u32 0, 2
    %v4 = vld [vmem:[%s0] sm:%s3]
    %5 = vst [vmem:[#allocation1] sm:%s3] %v4
    %v6 = vld [vmem:[#allocation1] sm:$0x1]
    %vm7 = vcmask 130048
    %8 = vst.msk [vmem:[#allocation0] sm:$0x1] %vm7, %v6
    %s9 = scalar_lea.vmem [#allocation1], 1
    %v10 = vld [vmem:[%s9] sm:$0x1]
    %11 = vrot.lane.b32.xlu0 %v10, 16
    %v12 = vpop.permute.xlu0 %11
    %vm13 = vcmask 261248
    %14 = vst.msk [vmem:[#allocation0] sm:$0x1] %vm13, %v12
    %s16 = sshllo.u32 0, 1
    %v18 = vld [vmem:[#allocation0] sm:%s16]
    %s19 = sshllo.u32 0, 1
    %20 = vst [vmem:[%s1] sm:%s19] %v18

// kernel: vit_forward_pallas.1
$region0: #{vit_forward_pallas.1}
  #allocation0 [shape = 'u32[]', space=smem, size = 0x4, offset = 0x4, fixed_abs, tag = 'smem constant byte address 0x4 - core index']
  #allocation1 [shape = 'u32[144,128]{1,0:T(1,128)}', space=vmem, size = 0x12000, scoped, tag = 'internal scratch']
  %s0 = inlined_call_operand.vmem [shape: f32[48,64], index: 0, kind: input, shape index: {}]
  %s1 = inlined_call_operand.vmem [shape: f32[168,128], index: 1, kind: input, shape index: {}]
  %s2 = inlined_call_operand.vmem [shape: bf16[64,32], index: 2, kind: input, shape index: {}]
  %s3 = inlined_call_operand.vmem [shape: bf16[2,32,128], index: 3, kind: input, shape index: {}]
  %s4 = inlined_call_operand.vmem [shape: bf16[2,32,128], index: 4, kind: input, shape index: {}]
  %s5 = inlined_call_operand.vmem [shape: bf16[2,128,32], index: 5, kind: input, shape index: {}]
  %s6 = inlined_call_operand.vmem [shape: bf16[32,128], index: 6, kind: input, shape index: {}]
  %s7 = inlined_call_operand.vmem [shape: f32[48,128], index: 7, kind: output, shape index: {}]
  %s8 = sld [smem:[#allocation0]]
  $region38: #{vit_forward_pallas.1} parent=0
    _
  %s10 = ssub.s32 1, %s8
  %s11 = scalar_select 0, %s10, %s8
  // Predicated region
  $region2: #{vit_forward_pallas.1} parent=0 // pred_check
    _
  $region3: #{vit_forward_pallas.1} parent=0 // pred_check_branch
    %13 = sbr.rel (0) target = $region5
  $region4: #{vit_forward_pallas.1} parent=0 // pred_region
    _
  $region5: #{vit_forward_pallas.1} parent=0 // pred_fallthru
    _
  // Predicated region
  $region6: #{vit_forward_pallas.1} parent=0 // pred_check
    _
  $region7: #{vit_forward_pallas.1} parent=0 // pred_check_branch
    %15 = sbr.rel (0) target = $region9
  $region8: #{vit_forward_pallas.1} parent=0 // pred_region
    _
  $region9: #{vit_forward_pallas.1} parent=0 // pred_fallthru
    _
  // Predicated region
  $region10: #{vit_forward_pallas.1} parent=0 // pred_check
    _
  $region11: #{vit_forward_pallas.1} parent=0 // pred_check_branch
    %17 = sbr.rel (0) target = $region13
  $region12: #{vit_forward_pallas.1} parent=0 // pred_region
    _
  $region13: #{vit_forward_pallas.1} parent=0 // pred_fallthru
    _
  // Predicated region
  $region14: #{vit_forward_pallas.1} parent=0 // pred_check
    _
  $region15: #{vit_forward_pallas.1} parent=0 // pred_check_branch
    %19 = sbr.rel (0) target = $region17
  $region16: #{vit_forward_pallas.1} parent=0 // pred_region
    _
  $region17: #{vit_forward_pallas.1} parent=0 // pred_fallthru
    _
  // Predicated region
  $region18: #{vit_forward_pallas.1} parent=0 // pred_check
    _
  $region19: #{vit_forward_pallas.1} parent=0 // pred_check_branch
    %21 = sbr.rel (0) target = $region21
  $region20: #{vit_forward_pallas.1} parent=0 // pred_region
    _
  $region21: #{vit_forward_pallas.1} parent=0 // pred_fallthru
    _
  // Predicated region
  $region22: #{vit_forward_pallas.1} parent=0 // pred_check
    _
  $region23: #{vit_forward_pallas.1} parent=0 // pred_check_branch
    %23 = sbr.rel (0) target = $region25
  $region24: #{vit_forward_pallas.1} parent=0 // pred_region
    _
  $region25: #{vit_forward_pallas.1} parent=0 // pred_fallthru
    _
  // Predicated region
  $region26: #{vit_forward_pallas.1} parent=0 // pred_check
    _
  $region27: #{vit_forward_pallas.1} parent=0 // pred_check_branch
    %25 = sbr.rel (0) target = $region29
  $region28: #{vit_forward_pallas.1} parent=0 // pred_region
    _
  $region29: #{vit_forward_pallas.1} parent=0 // pred_fallthru
    _
  %v27 = vld [vmem:[%s1] sm:$0xff]
  %v28 = vld [vmem:[%s1 + $0x8] sm:$0xff]
  %v29 = vld [vmem:[%s1 + $0x10] sm:$0xff]
  %v30 = vld [vmem:[%s1 + $0x18] sm:$0xff]
  %v31 = vld [vmem:[%s1 + $0x20] sm:$0xff]
  %v32 = vld [vmem:[%s1 + $0x28] sm:$0xff]
  %v33 = vld [vmem:[%s1 + $0x30] sm:$0xff]
  %v34 = vld [vmem:[%s1 + $0x38] sm:$0xff]
  %v35 = vld [vmem:[%s1 + $0x40] sm:$0xff]
  %v36 = vld [vmem:[%s1 + $0x48] sm:$0xff]
  %v37 = vld [vmem:[%s1 + $0x50] sm:$0xff]
  %v38 = vld [vmem:[%s1 + $0x58] sm:$0xff]
  %v39 = vld [vmem:[%s1 + $0x60] sm:$0xff]
  %v40 = vld [vmem:[%s1 + $0x68] sm:$0xff]
  %v41 = vld [vmem:[%s1 + $0x70] sm:$0xff]
  %v42 = vld [vmem:[%s1 + $0x78] sm:$0xff]
  %v43 = vld [vmem:[%s1 + $0x80] sm:$0xff]
  %v44 = vld [vmem:[%s1 + $0x88] sm:$0xff]
  %v45 = vld [vmem:[%s1 + $0x90] sm:$0x1]
  %v46 = vld [vmem:[%s1 + $0x91] sm:$0x1]
  %v47 = vld [vmem:[%s1 + $0x92] sm:$0x1]
  %v48 = vld [vmem:[%s0] sm:$0xff]
  %v49 = vld [vmem:[%s0 + $0x8] sm:$0xff]
  %v50 = vld [vmem:[%s0 + $0x10] sm:$0xff]
  %v51 = vld [vmem:[%s0 + $0x18] sm:$0xff]
  %v52 = vld [vmem:[%s0 + $0x20] sm:$0xff]
  %v53 = vld [vmem:[%s0 + $0x28] sm:$0xff]
  %v54 = vpack.c.bf16 %v49, %v48
  %v55 = vpack.c.bf16 %v51, %v50
  %v56 = vpack.c.bf16 %v53, %v52
  %v57 = vld [vmem:[%s2] sm:$0xf]
  %v58 = vld [vmem:[%s2 + $0x4] sm:$0xf]
  %v59 = vld [vmem:[%s2 + $0x8] sm:$0xf]
  %v60 = vld [vmem:[%s2 + $0xc] sm:$0xf]
  %v61 = vld [vmem:[%s2 + $0x10] sm:$0xf]
  %v62 = vld [vmem:[%s2 + $0x14] sm:$0xf]
  %v63 = vld [vmem:[%s2 + $0x18] sm:$0xf]
  %v64 = vld [vmem:[%s2 + $0x1c] sm:$0xf]
  %v73 = vunpack.c.l.b16 %v57
  %v74 = vunpack.c.l.b16 %v58
  %v75 = vunpack.c.l.b16 %v59
  %v76 = vunpack.c.l.b16 %v60
  %v77 = vunpack.c.l.b16 %v61
  %v78 = vunpack.c.l.b16 %v62
  %v79 = vunpack.c.l.b16 %v63
  %v80 = vunpack.c.l.b16 %v64
  %v81 = vpack.c.b16 %v74, %v73
  %v82 = vpack.c.b16 %v76, %v75
  %v83 = vpack.c.b16 %v78, %v77
  %v84 = vpack.c.b16 %v80, %v79
  %vm89 = vcmask 523264
  %v91 = vsel %vm89, %v54, 0
  %v94 = vsel %vm89, %v55, 0
  %v97 = vsel %vm89, %v56, 0
  %99 = vmatprep.subr.bf16.mxu0 0
  %100 = vmatpush1.bf16.msra.mxu0 %v81
  %101 = vmatprep.subr.bf16.mxu0 0
  %102 = vmatpush1.bf16.msra.mxu0 %v82
  %103 = vmatprep.subr.bf16.mxu0 0
  %104 = vmatpush1.bf16.msra.mxu0 %v83
  %105 = vmatprep.subr.bf16.mxu0 0
  %106 = vmatpush1.bf16.msra.mxu0 %v84
  %107 = vmatprep.subr.bf16.mxu0 0
  %108 = vmatpush1.bf16.msra.mxu0 0
  %109 = vmatprep.subr.bf16.mxu0 0
  %110 = vmatpush1.bf16.msra.mxu0 0
  %111 = vmatprep.subr.bf16.mxu0 0
  %112 = vmatpush1.bf16.msra.mxu0 0
  %113 = vmatprep.subr.bf16.mxu0 0
  %114 = vmatpush1.bf16.msra.mxu0 0
  %115 = vmatprep.subr.bf16.mxu0 0
  %116 = vmatpush1.bf16.msra.mxu0 0
  %117 = vmatprep.subr.bf16.mxu0 0
  %118 = vmatpush1.bf16.msra.mxu0 0
  %119 = vmatprep.subr.bf16.mxu0 0
  %120 = vmatpush1.bf16.msra.mxu0 0
  %121 = vmatprep.subr.bf16.mxu0 0
  %122 = vmatpush1.bf16.msra.mxu0 0
  %123 = vmatprep.subr.bf16.mxu0 0
  %124 = vmatpush1.bf16.msra.mxu0 0
  %125 = vmatprep.subr.bf16.mxu0 0
  %126 = vmatpush1.bf16.msra.mxu0 0
  %127 = vmatprep.subr.bf16.mxu0 0
  %128 = vmatpush1.bf16.msra.mxu0 0
  %129 = vmatprep.subr.bf16.mxu0 0
  %130 = vmatpush1.bf16.msra.mxu0 0
  %131 = vmatprep.mubr.bf16.mxu0 0
  %132 = vmatmul.mubr.bf16.gmra.mrb[0].mxu0 %v91
  %v133 = vpop.f32.mrb[0].mxu0
  %v134 = vadd.f32 %v27, %v133
  %v135 = vpop.f32.mrb[0].mxu0
  %v136 = vpop.f32.mrb[0].mxu0
  %v137 = vadd.f32 %v28, %v136
  %v138 = vpop.f32.mrb[0].mxu0
  %139 = vmatprep.mubr.bf16.mxu0 0
  %140 = vmatmul.mubr.bf16.gmra.mrb[0].mxu0 %v94
  %v141 = vpop.f32.mrb[0].mxu0
  %v142 = vadd.f32 %v29, %v141
  %v143 = vpop.f32.mrb[0].mxu0
  %v144 = vpop.f32.mrb[0].mxu0
  %v145 = vadd.f32 %v30, %v144
  %v146 = vpop.f32.mrb[0].mxu0
  %147 = vmatprep.mubr.bf16.mxu0 0
  %148 = vmatmul.mubr.bf16.gmra.mrb[0].mxu0 %v97
  %v149 = vpop.f32.mrb[0].mxu0
  %v150 = vadd.f32 %v31, %v149
  %v151 = vpop.f32.mrb[0].mxu0
  %v152 = vpop.f32.mrb[0].mxu0
  %v153 = vadd.f32 %v32, %v152
  %v154 = vpop.f32.mrb[0].mxu0
  %155 = vdwg.mxu0
  %v156 = vld [vmem:[%s1 + $0x98] sm:$0x1]
  %v157 = vld [vmem:[%s1 + $0x99] sm:$0x1]
  %v158 = vld [vmem:[%s1 + $0x9a] sm:$0x1]
  %v159 = vld [vmem:[%s1 + $0x9b] sm:$0x1]
  %v160 = vld [vmem:[%s1 + $0x9c] sm:$0x1]
  %v161 = vld [vmem:[%s1 + $0x9d] sm:$0x1]
  %v162 = vld [vmem:[%s1 + $0x9e] sm:$0x1]
  %vm163 = vcmask 261120
  %v164 = vsel %vm163, %v134, 0.0
  %165 = vadd.xlane.f32.xlu0 %v164
  %v166 = vpop.xlane.xlu0 %165
  %v167 = vsel %vm163, %v137, 0.0
  %168 = vadd.xlane.f32.xlu0 %v167
  %v169 = vpop.xlane.xlu0 %168
  %v170 = vsel %vm163, %v142, 0.0
  %171 = vadd.xlane.f32.xlu0 %v170
  %v172 = vpop.xlane.xlu0 %171
  %v173 = vsel %vm163, %v145, 0.0
  %174 = vadd.xlane.f32.xlu0 %v173
  %v175 = vpop.xlane.xlu0 %174
  %v176 = vsel %vm163, %v150, 0.0
  %177 = vadd.xlane.f32.xlu0 %v176
  %v178 = vpop.xlane.xlu0 %177
  %v179 = vsel %vm163, %v153, 0.0
  %180 = vadd.xlane.f32.xlu0 %v179
  %v181 = vpop.xlane.xlu0 %180
  %v182 = vrcp.pop 32.0
  %v183 = vmul.f32 %v166, %v182
  %v184 = vmul.f32 %v169, %v182
  %v185 = vmul.f32 %v172, %v182
  %v186 = vmul.f32 %v175, %v182
  %v187 = vmul.f32 %v178, %v182
  %v188 = vmul.f32 %v181, %v182
  %v189 = vsub.f32 %v134, %v183
  %v190 = vsub.f32 %v137, %v184
  %v191 = vsub.f32 %v142, %v185
  %v192 = vsub.f32 %v145, %v186
  %v193 = vsub.f32 %v150, %v187
  %v194 = vsub.f32 %v153, %v188
  %v195 = vmul.f32 %v189, %v189
  %v196 = vmul.f32 %v190, %v190
  %v197 = vmul.f32 %v191, %v191
  %v198 = vmul.f32 %v192, %v192
  %v199 = vmul.f32 %v193, %v193
  %v200 = vmul.f32 %v194, %v194
  %v201 = vsel %vm163, %v195, 0.0
  %202 = vadd.xlane.f32.xlu0 %v201
  %v203 = vpop.xlane.xlu0 %202
  %v204 = vsel %vm163, %v196, 0.0
  %205 = vadd.xlane.f32.xlu0 %v204
  %v206 = vpop.xlane.xlu0 %205
  %v207 = vsel %vm163, %v197, 0.0
  %208 = vadd.xlane.f32.xlu0 %v207
  %v209 = vpop.xlane.xlu0 %208
  %v210 = vsel %vm163, %v198, 0.0
  %211 = vadd.xlane.f32.xlu0 %v210
  %v212 = vpop.xlane.xlu0 %211
  %v213 = vsel %vm163, %v199, 0.0
  %214 = vadd.xlane.f32.xlu0 %v213
  %v215 = vpop.xlane.xlu0 %214
  %v216 = vsel %vm163, %v200, 0.0
  %217 = vadd.xlane.f32.xlu0 %v216
  %v218 = vpop.xlane.xlu0 %217
  %v219 = vmul.f32 %v203, %v182
  %v220 = vmul.f32 %v206, %v182
  %v221 = vmul.f32 %v209, %v182
  %v222 = vmul.f32 %v212, %v182
  %v223 = vmul.f32 %v215, %v182
  %v224 = vmul.f32 %v218, %v182
  %v225 = vadd.f32 %v219, 1e-05
  %v226 = vadd.f32 %v220, 1e-05
  %v227 = vadd.f32 %v221, 1e-05
  %v228 = vadd.f32 %v222, 1e-05
  %v229 = vadd.f32 %v223, 1e-05
  %v230 = vadd.f32 %v224, 1e-05
  %v231 = vrsqrt.pop %v225
  %v232 = vrsqrt.pop %v226
  %v233 = vrsqrt.pop %v227
  %v234 = vrsqrt.pop %v228
  %v235 = vrsqrt.pop %v229
  %v236 = vrsqrt.pop %v230
  %v237 = vmul.f32 %v189, %v231
  %v238 = vmul.f32 %v190, %v232
  %v239 = vmul.f32 %v191, %v233
  %v240 = vmul.f32 %v192, %v234
  %v241 = vmul.f32 %v193, %v235
  %v242 = vmul.f32 %v194, %v236
  %v243 = vlaneseq
  %v244 = vshrl.u32 %v243, 7
  %v245 = vsub.s32 0, %v244
  %v246 = vrot.slane %v156, %v245
  %v247 = vmul.f32 %v237, %v246
  %v248 = vmul.f32 %v238, %v246
  %v249 = vmul.f32 %v239, %v246
  %v250 = vmul.f32 %v240, %v246
  %v251 = vmul.f32 %v241, %v246
  %v252 = vmul.f32 %v242, %v246
  %v253 = vlaneseq
  %v254 = vshrl.u32 %v253, 7
  %v255 = vsub.s32 0, %v254
  %v256 = vrot.slane %v157, %v255
  %v257 = vadd.f32 %v247, %v256
  %v258 = vadd.f32 %v248, %v256
  %v259 = vadd.f32 %v249, %v256
  %v260 = vadd.f32 %v250, %v256
  %v261 = vadd.f32 %v251, %v256
  %v262 = vadd.f32 %v252, %v256
  %v263 = vpack.c.bf16 %v258, %v257
  %v264 = vpack.c.bf16 %v260, %v259
  %v265 = vpack.c.bf16 %v262, %v261
  %v266 = vld [vmem:[%s3] sm:$0xf]
  %v267 = vld [vmem:[%s3 + $0x4] sm:$0xf]
  %v268 = vld [vmem:[%s3 + $0x8] sm:$0xf]
  %v269 = vld [vmem:[%s3 + $0xc] sm:$0xf]
  %v270 = vlaneseq
  %v271 = vshrl.u32 %v270, 7
  %v272 = vsub.s32 0, %v271
  %v273 = vrot.slane %v160, %v272
  %v278 = vunpack.c.l.b16 %v266
  %v279 = vunpack.c.l.b16 %v267
  %v280 = vunpack.c.l.b16 %v268
  %v281 = vunpack.c.l.b16 %v269
  %v282 = vpack.c.b16 %v279, %v278
  %v283 = vpack.c.b16 %v281, %v280
  %v287 = vsel %vm163, %v263, 0
  %v290 = vsel %vm163, %v264, 0
  %v293 = vsel %vm163, %v265, 0
  %295 = vmatprep.subr.bf16.mxu0 0
  %296 = vmatpush1.bf16.msra.mxu0 %v282
  %297 = vmatprep.subr.bf16.mxu0 0
  %298 = vmatpush1.bf16.msra.mxu0 %v283
  %299 = vmatprep.subr.bf16.mxu0 0
  %300 = vmatpush1.bf16.msra.mxu0 0
  %301 = vmatprep.subr.bf16.mxu0 0
  %302 = vmatpush1.bf16.msra.mxu0 0
  %303 = vmatprep.subr.bf16.mxu0 0
  %304 = vmatpush1.bf16.msra.mxu0 0
  %305 = vmatprep.subr.bf16.mxu0 0
  %306 = vmatpush1.bf16.msra.mxu0 0
  %307 = vmatprep.subr.bf16.mxu0 0
  %308 = vmatpush1.bf16.msra.mxu0 0
  %309 = vmatprep.subr.bf16.mxu0 0
  %310 = vmatpush1.bf16.msra.mxu0 0
  %311 = vmatprep.subr.bf16.mxu0 0
  %312 = vmatpush1.bf16.msra.mxu0 0
  %313 = vmatprep.subr.bf16.mxu0 0
  %314 = vmatpush1.bf16.msra.mxu0 0
  %315 = vmatprep.subr.bf16.mxu0 0
  %316 = vmatpush1.bf16.msra.mxu0 0
  %317 = vmatprep.subr.bf16.mxu0 0
  %318 = vmatpush1.bf16.msra.mxu0 0
  %319 = vmatprep.subr.bf16.mxu0 0
  %320 = vmatpush1.bf16.msra.mxu0 0
  %321 = vmatprep.subr.bf16.mxu0 0
  %322 = vmatpush1.bf16.msra.mxu0 0
  %323 = vmatprep.subr.bf16.mxu0 0
  %324 = vmatpush1.bf16.msra.mxu0 0
  %325 = vmatprep.subr.bf16.mxu0 0
  %326 = vmatpush1.bf16.msra.mxu0 0
  %327 = vmatprep.mubr.bf16.mxu0 0
  %328 = vmatmul.mubr.bf16.gmra.mrb[0].mxu0 %v287
  %v329 = vpop.f32.mrb[0].mxu0
  %v330 = vadd.f32 %v273, %v329
  %v331 = vpop.f32.mrb[0].mxu0
  %v332 = vpop.f32.mrb[0].mxu0
  %v333 = vadd.f32 %v273, %v332
  %v334 = vpop.f32.mrb[0].mxu0
  %335 = vmatprep.mubr.bf16.mxu0 0
  %336 = vmatmul.mubr.bf16.gmra.mrb[0].mxu0 %v290
  %v337 = vpop.f32.mrb[0].mxu0
  %v338 = vadd.f32 %v273, %v337
  %v339 = vpop.f32.mrb[0].mxu0
  %v340 = vpop.f32.mrb[0].mxu0
  %v341 = vadd.f32 %v273, %v340
  %v342 = vpop.f32.mrb[0].mxu0
  %343 = vmatprep.mubr.bf16.mxu0 0
  %344 = vmatmul.mubr.bf16.gmra.mrb[0].mxu0 %v293
  %v345 = vpop.f32.mrb[0].mxu0
  %v346 = vadd.f32 %v273, %v345
  %v347 = vpop.f32.mrb[0].mxu0
  %v348 = vpop.f32.mrb[0].mxu0
  %v349 = vadd.f32 %v273, %v348
  %v350 = vpop.f32.mrb[0].mxu0
  %351 = vdwg.mxu0
  %358 = vrot.lane.b32.xlu0 %v330, 96
  %v359 = vpop.permute.xlu0 %358
  %360 = vrot.lane.b32.xlu0 %v333, 96
  %v361 = vpop.permute.xlu0 %360
  %362 = vrot.lane.b32.xlu0 %v338, 96
  %v363 = vpop.permute.xlu0 %362
  %364 = vrot.lane.b32.xlu0 %v341, 96
  %v365 = vpop.permute.xlu0 %364
  %366 = vrot.lane.b32.xlu0 %v346, 96
  %v367 = vpop.permute.xlu0 %366
  %368 = vrot.lane.b32.xlu0 %v349, 96
  %v369 = vpop.permute.xlu0 %368
  %v376 = vpack.c.bf16 %v333, %v330
  %v377 = vpack.c.bf16 %v341, %v338
  %v378 = vpack.c.bf16 %v349, %v346
  %v379 = vpack.c.bf16 %v361, %v359
  %v380 = vpack.c.bf16 %v365, %v363
  %v381 = vpack.c.bf16 %v369, %v367
  %385 = vrot.lane.b32.xlu0 %v376, 64
  %v386 = vpop.permute.xlu0 %385
  %387 = vrot.lane.b32.xlu0 %v377, 64
  %v388 = vpop.permute.xlu0 %387
  %389 = vrot.lane.b32.xlu0 %v378, 64
  %v390 = vpop.permute.xlu0 %389
  %v392 = vsel %vm163, %v376, 0
  %v395 = vsel %vm163, %v377, 0
  %v398 = vsel %vm163, %v378, 0
  %v401 = vsel %vm163, %v379, 0
  %v404 = vsel %vm163, %v380, 0
  %v407 = vsel %vm163, %v381, 0
  %v410 = vsel %vm163, %v386, 0
  %v413 = vsel %vm163, %v388, 0
  %v416 = vsel %vm163, %v390, 0
  %418 = vmatprep.subr.bf16.mxu0 0
  %419 = vmatpush1.bf16.xpose.msra.mxu0 %v410
  %420 = vmatprep.subr.bf16.mxu0 0
  %421 = vmatpush1.bf16.xpose.msra.mxu0 %v413
  %422 = vmatprep.subr.bf16.mxu0 0
  %423 = vmatpush1.bf16.xpose.msra.mxu0 %v416
  %424 = vmatprep.subr.bf16.mxu0 0
  %425 = vmatpush1.bf16.xpose.msra.mxu0 0
  %426 = vmatprep.subr.bf16.mxu0 0
  %427 = vmatpush1.bf16.xpose.msra.mxu0 0
  %428 = vmatprep.subr.bf16.mxu0 0
  %429 = vmatpush1.bf16.xpose.msra.mxu0 0
  %430 = vmatprep.subr.bf16.mxu0 0
  %431 = vmatpush1.bf16.xpose.msra.mxu0 0
  %432 = vmatprep.subr.bf16.mxu0 0
  %433 = vmatpush1.bf16.xpose.msra.mxu0 0
  %434 = vmatprep.subr.bf16.mxu0 0
  %435 = vmatpush1.bf16.xpose.msra.mxu0 0
  %436 = vmatprep.subr.bf16.mxu0 0
  %437 = vmatpush1.bf16.xpose.msra.mxu0 0
  %438 = vmatprep.subr.bf16.mxu0 0
  %439 = vmatpush1.bf16.xpose.msra.mxu0 0
  %440 = vmatprep.subr.bf16.mxu0 0
  %441 = vmatpush1.bf16.xpose.msra.mxu0 0
  %442 = vmatprep.subr.bf16.mxu0 0
  %443 = vmatpush1.bf16.xpose.msra.mxu0 0
  %444 = vmatprep.subr.bf16.mxu0 0
  %445 = vmatpush1.bf16.xpose.msra.mxu0 0
  %446 = vmatprep.subr.bf16.mxu0 0
  %447 = vmatpush1.bf16.xpose.msra.mxu0 0
  %448 = vmatprep.subr.bf16.mxu0 0
  %449 = vmatpush1.bf16.xpose.msra.mxu0 0
  %450 = vmatprep.mubr.bf16.mxu0 0
  %451 = vmatmul.mubr.bf16.gmra.mrb[0].mxu0 %v392
  %v452 = vpop.f32.mrb[0].mxu0
  %v453 = vadd.f32 %v33, %v452
  %v454 = vpop.f32.mrb[0].mxu0
  %v455 = vpop.f32.mrb[0].mxu0
  %v456 = vadd.f32 %v34, %v455
  %v457 = vpop.f32.mrb[0].mxu0
  %458 = vmatprep.mubr.bf16.mxu0 0
  %459 = vmatmul.mubr.bf16.gmra.mrb[0].mxu0 %v395
  %v460 = vpop.f32.mrb[0].mxu0
  %v461 = vadd.f32 %v35, %v460
  %v462 = vpop.f32.mrb[0].mxu0
  %v463 = vpop.f32.mrb[0].mxu0
  %v464 = vadd.f32 %v36, %v463
  %v465 = vpop.f32.mrb[0].mxu0
  %466 = vmatprep.mubr.bf16.mxu0 0
  %467 = vmatmul.mubr.bf16.gmra.mrb[0].mxu0 %v398
  %v468 = vpop.f32.mrb[0].mxu0
  %v469 = vadd.f32 %v37, %v468
  %v470 = vpop.f32.mrb[0].mxu0
  %v471 = vpop.f32.mrb[0].mxu0
  %v472 = vadd.f32 %v38, %v471
  %v473 = vpop.f32.mrb[0].mxu0
  %474 = vmatprep.mubr.bf16.mxu0 0
  %475 = vmatmul.mubr.bf16.gmra.mrb[0].mxu0 %v401
  %v476 = vpop.f32.mrb[0].mxu0
  %v477 = vadd.f32 %v39, %v476
  %v478 = vpop.f32.mrb[0].mxu0
  %v479 = vpop.f32.mrb[0].mxu0
  %v480 = vadd.f32 %v40, %v479
  %v481 = vpop.f32.mrb[0].mxu0
  %482 = vmatprep.mubr.bf16.mxu0 0
  %483 = vmatmul.mubr.bf16.gmra.mrb[0].mxu0 %v404
  %v484 = vpop.f32.mrb[0].mxu0
  %v485 = vadd.f32 %v41, %v484
  %v486 = vpop.f32.mrb[0].mxu0
  %v487 = vpop.f32.mrb[0].mxu0
  %v488 = vadd.f32 %v42, %v487
  %v489 = vpop.f32.mrb[0].mxu0
  %490 = vmatprep.mubr.bf16.mxu0 0
  %491 = vmatmul.mubr.bf16.gmra.mrb[0].mxu0 %v407
  %v492 = vpop.f32.mrb[0].mxu0
  %v493 = vadd.f32 %v43, %v492
  %v494 = vpop.f32.mrb[0].mxu0
  %v495 = vpop.f32.mrb[0].mxu0
  %v496 = vadd.f32 %v44, %v495
  %v497 = vpop.f32.mrb[0].mxu0
  %498 = vdwg.mxu0
  %vm499 = vcmask 392192
  %v500 = vsel %vm499, %v453, -inf
  %501 = vmax.xlane.f32.xlu0 %v500
  %v502 = vpop.xlane.xlu0 %501
  %v503 = vsel %vm499, %v456, -inf
  %504 = vmax.xlane.f32.xlu0 %v503
  %v505 = vpop.xlane.xlu0 %504
  %v506 = vsel %vm499, %v461, -inf
  %507 = vmax.xlane.f32.xlu0 %v506
  %v508 = vpop.xlane.xlu0 %507
  %v509 = vsel %vm499, %v464, -inf
  %510 = vmax.xlane.f32.xlu0 %v509
  %v511 = vpop.xlane.xlu0 %510
  %v512 = vsel %vm499, %v469, -inf
  %513 = vmax.xlane.f32.xlu0 %v512
  %v514 = vpop.xlane.xlu0 %513
  %v515 = vsel %vm499, %v472, -inf
  %516 = vmax.xlane.f32.xlu0 %v515
  %v517 = vpop.xlane.xlu0 %516
  %v518 = vsel %vm499, %v477, -inf
  %519 = vmax.xlane.f32.xlu0 %v518
  %v520 = vpop.xlane.xlu0 %519
  %v521 = vsel %vm499, %v480, -inf
  %522 = vmax.xlane.f32.xlu0 %v521
  %v523 = vpop.xlane.xlu0 %522
  %v524 = vsel %vm499, %v485, -inf
  %525 = vmax.xlane.f32.xlu0 %v524
  %v526 = vpop.xlane.xlu0 %525
  %v527 = vsel %vm499, %v488, -inf
  %528 = vmax.xlane.f32.xlu0 %v527
  %v529 = vpop.xlane.xlu0 %528
  %v530 = vsel %vm499, %v493, -inf
  %531 = vmax.xlane.f32.xlu0 %v530
  %v532 = vpop.xlane.xlu0 %531
  %v533 = vsel %vm499, %v496, -inf
  %534 = vmax.xlane.f32.xlu0 %v533
  %v535 = vpop.xlane.xlu0 %534
  %v536 = vsub.f32 %v453, %v502
  %v537 = vsub.f32 %v456, %v505
  %v538 = vsub.f32 %v461, %v508
  %v539 = vsub.f32 %v464, %v511
  %v540 = vsub.f32 %v469, %v514
  %v541 = vsub.f32 %v472, %v517
  %v542 = vsub.f32 %v477, %v520
  %v543 = vsub.f32 %v480, %v523
  %v544 = vsub.f32 %v485, %v526
  %v545 = vsub.f32 %v488, %v529
  %v546 = vsub.f32 %v493, %v532
  %v547 = vsub.f32 %v496, %v535
  %v548 = vmul.f32 %v536, 1.442695
  %v549 = vpow.pop %v548
  %v550 = vmul.f32 %v537, 1.442695
  %v551 = vpow.pop %v550
  %v552 = vmul.f32 %v538, 1.442695
  %v553 = vpow.pop %v552
  %v554 = vmul.f32 %v539, 1.442695
  %v555 = vpow.pop %v554
  %v556 = vmul.f32 %v540, 1.442695
  %v557 = vpow.pop %v556
  %v558 = vmul.f32 %v541, 1.442695
  %v559 = vpow.pop %v558
  %v560 = vmul.f32 %v542, 1.442695
  %v561 = vpow.pop %v560
  %v562 = vmul.f32 %v543, 1.442695
  %v563 = vpow.pop %v562
  %v564 = vmul.f32 %v544, 1.442695
  %v565 = vpow.pop %v564
  %v566 = vmul.f32 %v545, 1.442695
  %v567 = vpow.pop %v566
  %v568 = vmul.f32 %v546, 1.442695
  %v569 = vpow.pop %v568
  %v570 = vmul.f32 %v547, 1.442695
  %v571 = vpow.pop %v570
  %v572 = vsel %vm499, %v549, 0.0
  %573 = vadd.xlane.f32.xlu0 %v572
  %v574 = vpop.xlane.xlu0 %573
  %v575 = vsel %vm499, %v551, 0.0
  %576 = vadd.xlane.f32.xlu0 %v575
  %v577 = vpop.xlane.xlu0 %576
  %v578 = vsel %vm499, %v553, 0.0
  %579 = vadd.xlane.f32.xlu0 %v578
  %v580 = vpop.xlane.xlu0 %579
  %v581 = vsel %vm499, %v555, 0.0
  %582 = vadd.xlane.f32.xlu0 %v581
  %v583 = vpop.xlane.xlu0 %582
  %v584 = vsel %vm499, %v557, 0.0
  %585 = vadd.xlane.f32.xlu0 %v584
  %v586 = vpop.xlane.xlu0 %585
  %v587 = vsel %vm499, %v559, 0.0
  %588 = vadd.xlane.f32.xlu0 %v587
  %v589 = vpop.xlane.xlu0 %588
  %v590 = vsel %vm499, %v561, 0.0
  %591 = vadd.xlane.f32.xlu0 %v590
  %v592 = vpop.xlane.xlu0 %591
  %v593 = vsel %vm499, %v563, 0.0
  %594 = vadd.xlane.f32.xlu0 %v593
  %v595 = vpop.xlane.xlu0 %594
  %v596 = vsel %vm499, %v565, 0.0
  %597 = vadd.xlane.f32.xlu0 %v596
  %v598 = vpop.xlane.xlu0 %597
  %v599 = vsel %vm499, %v567, 0.0
  %600 = vadd.xlane.f32.xlu0 %v599
  %v601 = vpop.xlane.xlu0 %600
  %v602 = vsel %vm499, %v569, 0.0
  %603 = vadd.xlane.f32.xlu0 %v602
  %v604 = vpop.xlane.xlu0 %603
  %v605 = vsel %vm499, %v571, 0.0
  %606 = vadd.xlane.f32.xlu0 %v605
  %v607 = vpop.xlane.xlu0 %606
  %v608 = vrcp.pop %v574
  %v609 = vrcp.pop %v577
  %v610 = vrcp.pop %v580
  %v611 = vrcp.pop %v583
  %v612 = vrcp.pop %v586
  %v613 = vrcp.pop %v589
  %v614 = vrcp.pop %v592
  %v615 = vrcp.pop %v595
  %v616 = vrcp.pop %v598
  %v617 = vrcp.pop %v601
  %v618 = vrcp.pop %v604
  %v619 = vrcp.pop %v607
  %v620 = vmul.f32 %v549, %v608
  %v621 = vmul.f32 %v551, %v609
  %v622 = vmul.f32 %v553, %v610
  %v623 = vmul.f32 %v555, %v611
  %v624 = vmul.f32 %v557, %v612
  %v625 = vmul.f32 %v559, %v613
  %v626 = vmul.f32 %v561, %v614
  %v627 = vmul.f32 %v563, %v615
  %v628 = vmul.f32 %v565, %v616
  %v629 = vmul.f32 %v567, %v617
  %v630 = vmul.f32 %v569, %v618
  %v631 = vmul.f32 %v571, %v619
  %v632 = vpack.c.bf16 %v621, %v620
  %v633 = vpack.c.bf16 %v623, %v622
  %v634 = vpack.c.bf16 %v625, %v624
  %v635 = vpack.c.bf16 %v627, %v626
  %v636 = vpack.c.bf16 %v629, %v628
  %v637 = vpack.c.bf16 %v631, %v630
  %638 = vrot.lane.b32.xlu0 %v376, 32
  %v639 = vpop.permute.xlu0 %638
  %640 = vrot.lane.b32.xlu0 %v377, 32
  %v641 = vpop.permute.xlu0 %640
  %642 = vrot.lane.b32.xlu0 %v378, 32
  %v643 = vpop.permute.xlu0 %642
  %v648 = vsel %vm499, %v632, 0
  %v651 = vsel %vm499, %v633, 0
  %v654 = vsel %vm499, %v634, 0
  %v657 = vsel %vm499, %v635, 0
  %v660 = vsel %vm499, %v636, 0
  %v663 = vsel %vm499, %v637, 0
  %665 = vmatprep.subr.bf16.mxu0 0
  %666 = vmatpush1.bf16.msra.mxu0 %v639
  %667 = vmatprep.subr.bf16.mxu0 0
  %668 = vmatpush1.bf16.msra.mxu0 %v641
  %669 = vmatprep.subr.bf16.mxu0 0
  %670 = vmatpush1.bf16.msra.mxu0 %v643
  %671 = vmatprep.subr.bf16.mxu0 0
  %672 = vmatpush1.bf16.msra.mxu0 0
  %673 = vmatprep.subr.bf16.mxu0 0
  %674 = vmatpush1.bf16.msra.mxu0 0
  %675 = vmatprep.subr.bf16.mxu0 0
  %676 = vmatpush1.bf16.msra.mxu0 0
  %677 = vmatprep.subr.bf16.mxu0 0
  %678 = vmatpush1.bf16.msra.mxu0 0
  %679 = vmatprep.subr.bf16.mxu0 0
  %680 = vmatpush1.bf16.msra.mxu0 0
  %681 = vmatprep.subr.bf16.mxu0 0
  %682 = vmatpush1.bf16.msra.mxu0 0
  %683 = vmatprep.subr.bf16.mxu0 0
  %684 = vmatpush1.bf16.msra.mxu0 0
  %685 = vmatprep.subr.bf16.mxu0 0
  %686 = vmatpush1.bf16.msra.mxu0 0
  %687 = vmatprep.subr.bf16.mxu0 0
  %688 = vmatpush1.bf16.msra.mxu0 0
  %689 = vmatprep.subr.bf16.mxu0 0
  %690 = vmatpush1.bf16.msra.mxu0 0
  %691 = vmatprep.subr.bf16.mxu0 0
  %692 = vmatpush1.bf16.msra.mxu0 0
  %693 = vmatprep.subr.bf16.mxu0 0
  %694 = vmatpush1.bf16.msra.mxu0 0
  %695 = vmatprep.subr.bf16.mxu0 0
  %696 = vmatpush1.bf16.msra.mxu0 0
  %697 = vmatprep.mubr.bf16.mxu0 0
  %698 = vmatmul.mubr.bf16.gmra.mrb[0].mxu0 %v648
  %v699 = vpop.f32.mrb[0].mxu0
  %v700 = vadd.f32 0.0, %v699
  %v701 = vpop.f32.mrb[0].mxu0
  %v702 = vpop.f32.mrb[0].mxu0
  %v703 = vadd.f32 0.0, %v702
  %v704 = vpop.f32.mrb[0].mxu0
  %705 = vmatprep.mubr.bf16.mxu0 0
  %706 = vmatmul.mubr.bf16.gmra.mrb[0].mxu0 %v651
  %v707 = vpop.f32.mrb[0].mxu0
  %v708 = vadd.f32 0.0, %v707
  %v709 = vpop.f32.mrb[0].mxu0
  %v710 = vpop.f32.mrb[0].mxu0
  %v711 = vadd.f32 0.0, %v710
  %v712 = vpop.f32.mrb[0].mxu0
  %713 = vmatprep.mubr.bf16.mxu0 0
  %714 = vmatmul.mubr.bf16.gmra.mrb[0].mxu0 %v654
  %v715 = vpop.f32.mrb[0].mxu0
  %v716 = vadd.f32 0.0, %v715
  %v717 = vpop.f32.mrb[0].mxu0
  %v718 = vpop.f32.mrb[0].mxu0
  %v719 = vadd.f32 0.0, %v718
  %v720 = vpop.f32.mrb[0].mxu0
  %721 = vmatprep.mubr.bf16.mxu0 0
  %722 = vmatmul.mubr.bf16.gmra.mrb[0].mxu0 %v657
  %v723 = vpop.f32.mrb[0].mxu0
  %v724 = vadd.f32 0.0, %v723
  %v725 = vpop.f32.mrb[0].mxu0
  %v726 = vpop.f32.mrb[0].mxu0
  %v727 = vadd.f32 0.0, %v726
  %v728 = vpop.f32.mrb[0].mxu0
  %729 = vmatprep.mubr.bf16.mxu0 0
  %730 = vmatmul.mubr.bf16.gmra.mrb[0].mxu0 %v660
  %v731 = vpop.f32.mrb[0].mxu0
  %v732 = vadd.f32 0.0, %v731
  %v733 = vpop.f32.mrb[0].mxu0
  %v734 = vpop.f32.mrb[0].mxu0
  %v735 = vadd.f32 0.0, %v734
  %v736 = vpop.f32.mrb[0].mxu0
  %737 = vmatprep.mubr.bf16.mxu0 0
  %738 = vmatmul.mubr.bf16.gmra.mrb[0].mxu0 %v663
  %v739 = vpop.f32.mrb[0].mxu0
  %v740 = vadd.f32 0.0, %v739
  %v741 = vpop.f32.mrb[0].mxu0
  %v742 = vpop.f32.mrb[0].mxu0
  %v743 = vadd.f32 0.0, %v742
  %v744 = vpop.f32.mrb[0].mxu0
  %745 = vdwg.mxu0
  %v746 = vlaneseq
  %v747 = vshrl.u32 %v746, 7
  %v748 = vsub.s32 0, %v747
  %v749 = vrot.slane %v45, %v748
  %v750 = vmul.f32 %v700, %v749
  %v751 = vmul.f32 %v703, %v749
  %v752 = vmul.f32 %v708, %v749
  %v753 = vmul.f32 %v711, %v749
  %v754 = vmul.f32 %v716, %v749
  %v755 = vmul.f32 %v719, %v749
  %v756 = vadd.f32 %v134, %v750
  %v757 = vadd.f32 %v137, %v751
  %v758 = vadd.f32 %v142, %v752
  %v759 = vadd.f32 %v145, %v753
  %v760 = vadd.f32 %v150, %v754
  %v761 = vadd.f32 %v153, %v755
  %v762 = vlaneseq
  %v763 = vshrl.u32 %v762, 7
  %v764 = vsub.s32 0, %v763
  %v765 = vrot.slane %v46, %v764
  %v766 = vmul.f32 %v724, %v765
  %v767 = vmul.f32 %v727, %v765
  %v768 = vmul.f32 %v732, %v765
  %v769 = vmul.f32 %v735, %v765
  %v770 = vmul.f32 %v740, %v765
  %v771 = vmul.f32 %v743, %v765
  %v772 = vadd.f32 %v756, %v766
  %v773 = vadd.f32 %v757, %v767
  %v774 = vadd.f32 %v758, %v768
  %v775 = vadd.f32 %v759, %v769
  %v776 = vadd.f32 %v760, %v770
  %v777 = vadd.f32 %v761, %v771
  %v778 = vsel %vm163, %v772, 0.0
  %779 = vadd.xlane.f32.xlu0 %v778
  %v780 = vpop.xlane.xlu0 %779
  %v781 = vsel %vm163, %v773, 0.0
  %782 = vadd.xlane.f32.xlu0 %v781
  %v783 = vpop.xlane.xlu0 %782
  %v784 = vsel %vm163, %v774, 0.0
  %785 = vadd.xlane.f32.xlu0 %v784
  %v786 = vpop.xlane.xlu0 %785
  %v787 = vsel %vm163, %v775, 0.0
  %788 = vadd.xlane.f32.xlu0 %v787
  %v789 = vpop.xlane.xlu0 %788
  %v790 = vsel %vm163, %v776, 0.0
  %791 = vadd.xlane.f32.xlu0 %v790
  %v792 = vpop.xlane.xlu0 %791
  %v793 = vsel %vm163, %v777, 0.0
  %794 = vadd.xlane.f32.xlu0 %v793
  %v795 = vpop.xlane.xlu0 %794
  %v796 = vmul.f32 %v780, %v182
  %v797 = vmul.f32 %v783, %v182
  %v798 = vmul.f32 %v786, %v182
  %v799 = vmul.f32 %v789, %v182
  %v800 = vmul.f32 %v792, %v182
  %v801 = vmul.f32 %v795, %v182
  %v802 = vsub.f32 %v772, %v796
  %v803 = vsub.f32 %v773, %v797
  %v804 = vsub.f32 %v774, %v798
  %v805 = vsub.f32 %v775, %v799
  %v806 = vsub.f32 %v776, %v800
  %v807 = vsub.f32 %v777, %v801
  %v808 = vmul.f32 %v802, %v802
  %v809 = vmul.f32 %v803, %v803
  %v810 = vmul.f32 %v804, %v804
  %v811 = vmul.f32 %v805, %v805
  %v812 = vmul.f32 %v806, %v806
  %v813 = vmul.f32 %v807, %v807
  %v814 = vsel %vm163, %v808, 0.0
  %815 = vadd.xlane.f32.xlu0 %v814
  %v816 = vpop.xlane.xlu0 %815
  %v817 = vsel %vm163, %v809, 0.0
  %818 = vadd.xlane.f32.xlu0 %v817
  %v819 = vpop.xlane.xlu0 %818
  %v820 = vsel %vm163, %v810, 0.0
  %821 = vadd.xlane.f32.xlu0 %v820
  %v822 = vpop.xlane.xlu0 %821
  %v823 = vsel %vm163, %v811, 0.0
  %824 = vadd.xlane.f32.xlu0 %v823
  %v825 = vpop.xlane.xlu0 %824
  %v826 = vsel %vm163, %v812, 0.0
  %827 = vadd.xlane.f32.xlu0 %v826
  %v828 = vpop.xlane.xlu0 %827
  %v829 = vsel %vm163, %v813, 0.0
  %830 = vadd.xlane.f32.xlu0 %v829
  %v831 = vpop.xlane.xlu0 %830
  %v832 = vmul.f32 %v816, %v182
  %v833 = vmul.f32 %v819, %v182
  %v834 = vmul.f32 %v822, %v182
  %v835 = vmul.f32 %v825, %v182
  %v836 = vmul.f32 %v828, %v182
  %v837 = vmul.f32 %v831, %v182
  %v838 = vadd.f32 %v832, 1e-05
  %v839 = vadd.f32 %v833, 1e-05
  %v840 = vadd.f32 %v834, 1e-05
  %v841 = vadd.f32 %v835, 1e-05
  %v842 = vadd.f32 %v836, 1e-05
  %v843 = vadd.f32 %v837, 1e-05
  %v844 = vrsqrt.pop %v838
  %v845 = vrsqrt.pop %v839
  %v846 = vrsqrt.pop %v840
  %v847 = vrsqrt.pop %v841
  %v848 = vrsqrt.pop %v842
  %v849 = vrsqrt.pop %v843
  %v850 = vmul.f32 %v802, %v844
  %v851 = vmul.f32 %v803, %v845
  %v852 = vmul.f32 %v804, %v846
  %v853 = vmul.f32 %v805, %v847
  %v854 = vmul.f32 %v806, %v848
  %v855 = vmul.f32 %v807, %v849
  %v856 = vlaneseq
  %v857 = vshrl.u32 %v856, 7
  %v858 = vsub.s32 0, %v857
  %v859 = vrot.slane %v158, %v858
  %v860 = vmul.f32 %v850, %v859
  %v861 = vmul.f32 %v851, %v859
  %v862 = vmul.f32 %v852, %v859
  %v863 = vmul.f32 %v853, %v859
  %v864 = vmul.f32 %v854, %v859
  %v865 = vmul.f32 %v855, %v859
  %v866 = vlaneseq
  %v867 = vshrl.u32 %v866, 7
  %v868 = vsub.s32 0, %v867
  %v869 = vrot.slane %v159, %v868
  %v870 = vadd.f32 %v860, %v869
  %v871 = vadd.f32 %v861, %v869
  %v872 = vadd.f32 %v862, %v869
  %v873 = vadd.f32 %v863, %v869
  %v874 = vadd.f32 %v864, %v869
  %v875 = vadd.f32 %v865, %v869
  %v876 = vpack.c.bf16 %v871, %v870
  %v877 = vpack.c.bf16 %v873, %v872
  %v878 = vpack.c.bf16 %v875, %v874
  %v879 = vld [vmem:[%s4] sm:$0xf]
  %v880 = vld [vmem:[%s4 + $0x4] sm:$0xf]
  %v881 = vld [vmem:[%s4 + $0x8] sm:$0xf]
  %v882 = vld [vmem:[%s4 + $0xc] sm:$0xf]
  %v883 = vlaneseq
  %v884 = vshrl.u32 %v883, 7
  %v885 = vsub.s32 0, %v884
  %v886 = vrot.slane %v161, %v885
  %v891 = vunpack.c.l.b16 %v879
  %v892 = vunpack.c.l.b16 %v880
  %v893 = vunpack.c.l.b16 %v881
  %v894 = vunpack.c.l.b16 %v882
  %v895 = vpack.c.b16 %v892, %v891
  %v896 = vpack.c.b16 %v894, %v893
  %v900 = vsel %vm163, %v876, 0
  %v903 = vsel %vm163, %v877, 0
  %v906 = vsel %vm163, %v878, 0
  %908 = vmatprep.subr.bf16.mxu0 0
  %909 = vmatpush1.bf16.msra.mxu0 %v895
  %910 = vmatprep.subr.bf16.mxu0 0
  %911 = vmatpush1.bf16.msra.mxu0 %v896
  %912 = vmatprep.subr.bf16.mxu0 0
  %913 = vmatpush1.bf16.msra.mxu0 0
  %914 = vmatprep.subr.bf16.mxu0 0
  %915 = vmatpush1.bf16.msra.mxu0 0
  %916 = vmatprep.subr.bf16.mxu0 0
  %917 = vmatpush1.bf16.msra.mxu0 0
  %918 = vmatprep.subr.bf16.mxu0 0
  %919 = vmatpush1.bf16.msra.mxu0 0
  %920 = vmatprep.subr.bf16.mxu0 0
  %921 = vmatpush1.bf16.msra.mxu0 0
  %922 = vmatprep.subr.bf16.mxu0 0
  %923 = vmatpush1.bf16.msra.mxu0 0
  %924 = vmatprep.subr.bf16.mxu0 0
  %925 = vmatpush1.bf16.msra.mxu0 0
  %926 = vmatprep.subr.bf16.mxu0 0
  %927 = vmatpush1.bf16.msra.mxu0 0
  %928 = vmatprep.subr.bf16.mxu0 0
  %929 = vmatpush1.bf16.msra.mxu0 0
  %930 = vmatprep.subr.bf16.mxu0 0
  %931 = vmatpush1.bf16.msra.mxu0 0
  %932 = vmatprep.subr.bf16.mxu0 0
  %933 = vmatpush1.bf16.msra.mxu0 0
  %934 = vmatprep.subr.bf16.mxu0 0
  %935 = vmatpush1.bf16.msra.mxu0 0
  %936 = vmatprep.subr.bf16.mxu0 0
  %937 = vmatpush1.bf16.msra.mxu0 0
  %938 = vmatprep.subr.bf16.mxu0 0
  %939 = vmatpush1.bf16.msra.mxu0 0
  %940 = vmatprep.mubr.bf16.mxu0 0
  %941 = vmatmul.mubr.bf16.gmra.mrb[0].mxu0 %v900
  %v942 = vpop.f32.mrb[0].mxu0
  %v943 = vadd.f32 %v886, %v942
  %v944 = vpop.f32.mrb[0].mxu0
  %v945 = vpop.f32.mrb[0].mxu0
  %v946 = vadd.f32 %v886, %v945
  %v947 = vpop.f32.mrb[0].mxu0
  %948 = vmatprep.mubr.bf16.mxu0 0
  %949 = vmatmul.mubr.bf16.gmra.mrb[0].mxu0 %v903
  %v950 = vpop.f32.mrb[0].mxu0
  %v951 = vadd.f32 %v886, %v950
  %v952 = vpop.f32.mrb[0].mxu0
  %v953 = vpop.f32.mrb[0].mxu0
  %v954 = vadd.f32 %v886, %v953
  %v955 = vpop.f32.mrb[0].mxu0
  %956 = vmatprep.mubr.bf16.mxu0 0
  %957 = vmatmul.mubr.bf16.gmra.mrb[0].mxu0 %v906
  %v958 = vpop.f32.mrb[0].mxu0
  %v959 = vadd.f32 %v886, %v958
  %v960 = vpop.f32.mrb[0].mxu0
  %v961 = vpop.f32.mrb[0].mxu0
  %v962 = vadd.f32 %v886, %v961
  %v963 = vpop.f32.mrb[0].mxu0
  %964 = vdwg.mxu0
  %v965 = vmul.f32 %v943, %v943
  %v966 = vmul.f32 %v946, %v946
  %v967 = vmul.f32 %v951, %v951
  %v968 = vmul.f32 %v954, %v954
  %v969 = vmul.f32 %v959, %v959
  %v970 = vmul.f32 %v962, %v962
  %v971 = vmul.f32 %v943, %v965
  %v972 = vmul.f32 %v946, %v966
  %v973 = vmul.f32 %v951, %v967
  %v974 = vmul.f32 %v954, %v968
  %v975 = vmul.f32 %v959, %v969
  %v976 = vmul.f32 %v962, %v970
  %v977 = vmul.f32 %v971, 0.044715
  %v978 = vmul.f32 %v972, 0.044715
  %v979 = vmul.f32 %v973, 0.044715
  %v980 = vmul.f32 %v974, 0.044715
  %v981 = vmul.f32 %v975, 0.044715
  %v982 = vmul.f32 %v976, 0.044715
  %v983 = vadd.f32 %v943, %v977
  %v984 = vadd.f32 %v946, %v978
  %v985 = vadd.f32 %v951, %v979
  %v986 = vadd.f32 %v954, %v980
  %v987 = vadd.f32 %v959, %v981
  %v988 = vadd.f32 %v962, %v982
  %v989 = vmul.f32 %v983, 0.7978846
  %v990 = vmul.f32 %v984, 0.7978846
  %v991 = vmul.f32 %v985, 0.7978846
  %v992 = vmul.f32 %v986, 0.7978846
  %v993 = vmul.f32 %v987, 0.7978846
  %v994 = vmul.f32 %v988, 0.7978846
  %v995 = vtanh.pop %v989
  %v996 = vtanh.pop %v990
  %v997 = vtanh.pop %v991
  %v998 = vtanh.pop %v992
  %v999 = vtanh.pop %v993
  %v1000 = vtanh.pop %v994
  %v1001 = vadd.f32 %v995, 1.0
  %v1002 = vadd.f32 %v996, 1.0
  %v1003 = vadd.f32 %v997, 1.0
  %v1004 = vadd.f32 %v998, 1.0
  %v1005 = vadd.f32 %v999, 1.0
  %v1006 = vadd.f32 %v1000, 1.0
  %v1007 = vmul.f32 %v1001, 0.5
  %v1008 = vmul.f32 %v1002, 0.5
  %v1009 = vmul.f32 %v1003, 0.5
  %v1010 = vmul.f32 %v1004, 0.5
  %v1011 = vmul.f32 %v1005, 0.5
  %v1012 = vmul.f32 %v1006, 0.5
  %v1013 = vmul.f32 %v943, %v1007
  %v1014 = vmul.f32 %v946, %v1008
  %v1015 = vmul.f32 %v951, %v1009
  %v1016 = vmul.f32 %v954, %v1010
  %v1017 = vmul.f32 %v959, %v1011
  %v1018 = vmul.f32 %v962, %v1012
  %v1019 = vpack.c.bf16 %v1014, %v1013
  %v1020 = vpack.c.bf16 %v1016, %v1015
  %v1021 = vpack.c.bf16 %v1018, %v1017
  %v1022 = vld [vmem:[%s5] sm:$0xf]
  %v1023 = vld [vmem:[%s5 + $0x4] sm:$0xf]
  %v1024 = vld [vmem:[%s5 + $0x8] sm:$0xf]
  %v1025 = vld [vmem:[%s5 + $0xc] sm:$0xf]
  %v1026 = vld [vmem:[%s5 + $0x10] sm:$0xf]
  %v1027 = vld [vmem:[%s5 + $0x14] sm:$0xf]
  %v1028 = vld [vmem:[%s5 + $0x18] sm:$0xf]
  %v1029 = vld [vmem:[%s5 + $0x1c] sm:$0xf]
  %v1030 = vld [vmem:[%s5 + $0x20] sm:$0xf]
  %v1031 = vld [vmem:[%s5 + $0x24] sm:$0xf]
  %v1032 = vld [vmem:[%s5 + $0x28] sm:$0xf]
  %v1033 = vld [vmem:[%s5 + $0x2c] sm:$0xf]
  %v1034 = vld [vmem:[%s5 + $0x30] sm:$0xf]
  %v1035 = vld [vmem:[%s5 + $0x34] sm:$0xf]
  %v1036 = vld [vmem:[%s5 + $0x38] sm:$0xf]
  %v1037 = vld [vmem:[%s5 + $0x3c] sm:$0xf]
  %v1038 = vlaneseq
  %v1039 = vshrl.u32 %v1038, 7
  %v1040 = vsub.s32 0, %v1039
  %v1041 = vrot.slane %v162, %v1040
  %v1058 = vunpack.c.l.b16 %v1022
  %v1059 = vunpack.c.l.b16 %v1023
  %v1060 = vunpack.c.l.b16 %v1024
  %v1061 = vunpack.c.l.b16 %v1025
  %v1062 = vunpack.c.l.b16 %v1026
  %v1063 = vunpack.c.l.b16 %v1027
  %v1064 = vunpack.c.l.b16 %v1028
  %v1065 = vunpack.c.l.b16 %v1029
  %v1066 = vunpack.c.l.b16 %v1030
  %v1067 = vunpack.c.l.b16 %v1031
  %v1068 = vunpack.c.l.b16 %v1032
  %v1069 = vunpack.c.l.b16 %v1033
  %v1070 = vunpack.c.l.b16 %v1034
  %v1071 = vunpack.c.l.b16 %v1035
  %v1072 = vunpack.c.l.b16 %v1036
  %v1073 = vunpack.c.l.b16 %v1037
  %v1074 = vpack.c.b16 %v1059, %v1058
  %v1075 = vpack.c.b16 %v1061, %v1060
  %v1076 = vpack.c.b16 %v1063, %v1062
  %v1077 = vpack.c.b16 %v1065, %v1064
  %v1078 = vpack.c.b16 %v1067, %v1066
  %v1079 = vpack.c.b16 %v1069, %v1068
  %v1080 = vpack.c.b16 %v1071, %v1070
  %v1081 = vpack.c.b16 %v1073, %v1072
  %1090 = vmatprep.subr.bf16.mxu0 0
  %1091 = vmatpush1.bf16.msra.mxu0 %v1074
  %1092 = vmatprep.subr.bf16.mxu0 0
  %1093 = vmatpush1.bf16.msra.mxu0 %v1075
  %1094 = vmatprep.subr.bf16.mxu0 0
  %1095 = vmatpush1.bf16.msra.mxu0 %v1076
  %1096 = vmatprep.subr.bf16.mxu0 0
  %1097 = vmatpush1.bf16.msra.mxu0 %v1077
  %1098 = vmatprep.subr.bf16.mxu0 0
  %1099 = vmatpush1.bf16.msra.mxu0 %v1078
  %1100 = vmatprep.subr.bf16.mxu0 0
  %1101 = vmatpush1.bf16.msra.mxu0 %v1079
  %1102 = vmatprep.subr.bf16.mxu0 0
  %1103 = vmatpush1.bf16.msra.mxu0 %v1080
  %1104 = vmatprep.subr.bf16.mxu0 0
  %1105 = vmatpush1.bf16.msra.mxu0 %v1081
  %1106 = vmatprep.subr.bf16.mxu0 0
  %1107 = vmatpush1.bf16.msra.mxu0 0
  %1108 = vmatprep.subr.bf16.mxu0 0
  %1109 = vmatpush1.bf16.msra.mxu0 0
  %1110 = vmatprep.subr.bf16.mxu0 0
  %1111 = vmatpush1.bf16.msra.mxu0 0
  %1112 = vmatprep.subr.bf16.mxu0 0
  %1113 = vmatpush1.bf16.msra.mxu0 0
  %1114 = vmatprep.subr.bf16.mxu0 0
  %1115 = vmatpush1.bf16.msra.mxu0 0
  %1116 = vmatprep.subr.bf16.mxu0 0
  %1117 = vmatpush1.bf16.msra.mxu0 0
  %1118 = vmatprep.subr.bf16.mxu0 0
  %1119 = vmatpush1.bf16.msra.mxu0 0
  %1120 = vmatprep.subr.bf16.mxu0 0
  %1121 = vmatpush1.bf16.msra.mxu0 0
  %1122 = vmatprep.mubr.bf16.mxu0 0
  %1123 = vmatmul.mubr.bf16.gmra.mrb[0].mxu0 %v1019
  %v1124 = vpop.f32.mrb[0].mxu0
  %v1125 = vadd.f32 %v1041, %v1124
  %v1126 = vpop.f32.mrb[0].mxu0
  %v1127 = vpop.f32.mrb[0].mxu0
  %v1128 = vadd.f32 %v1041, %v1127
  %v1129 = vpop.f32.mrb[0].mxu0
  %1130 = vmatprep.mubr.bf16.mxu0 0
  %1131 = vmatmul.mubr.bf16.gmra.mrb[0].mxu0 %v1020
  %v1132 = vpop.f32.mrb[0].mxu0
  %v1133 = vadd.f32 %v1041, %v1132
  %v1134 = vpop.f32.mrb[0].mxu0
  %v1135 = vpop.f32.mrb[0].mxu0
  %v1136 = vadd.f32 %v1041, %v1135
  %v1137 = vpop.f32.mrb[0].mxu0
  %1138 = vmatprep.mubr.bf16.mxu0 0
  %1139 = vmatmul.mubr.bf16.gmra.mrb[0].mxu0 %v1021
  %v1140 = vpop.f32.mrb[0].mxu0
  %v1141 = vadd.f32 %v1041, %v1140
  %v1142 = vpop.f32.mrb[0].mxu0
  %v1143 = vpop.f32.mrb[0].mxu0
  %v1144 = vadd.f32 %v1041, %v1143
  %v1145 = vpop.f32.mrb[0].mxu0
  %1146 = vdwg.mxu0
  %v1147 = vadd.f32 %v772, %v1125
  %v1148 = vadd.f32 %v773, %v1128
  %v1149 = vadd.f32 %v774, %v1133
  %v1150 = vadd.f32 %v775, %v1136
  %v1151 = vadd.f32 %v776, %v1141
  %v1152 = vadd.f32 %v777, %v1144
  %v1153 = vld [vmem:[%s1 + $0xa0] sm:$0x1]
  %v1154 = vld [vmem:[%s1 + $0xa1] sm:$0x1]
  %v1155 = vld [vmem:[%s1 + $0xa2] sm:$0x1]
  %v1156 = vld [vmem:[%s1 + $0xa3] sm:$0x1]
  %v1157 = vld [vmem:[%s1 + $0xa4] sm:$0x1]
  %v1158 = vld [vmem:[%s1 + $0xa5] sm:$0x1]
  %v1159 = vld [vmem:[%s1 + $0xa6] sm:$0x1]
  %v1160 = vsel %vm163, %v1147, 0.0
  %1161 = vadd.xlane.f32.xlu0 %v1160
  %v1162 = vpop.xlane.xlu0 %1161
  %v1163 = vsel %vm163, %v1148, 0.0
  %1164 = vadd.xlane.f32.xlu0 %v1163
  %v1165 = vpop.xlane.xlu0 %1164
  %v1166 = vsel %vm163, %v1149, 0.0
  %1167 = vadd.xlane.f32.xlu0 %v1166
  %v1168 = vpop.xlane.xlu0 %1167
  %v1169 = vsel %vm163, %v1150, 0.0
  %1170 = vadd.xlane.f32.xlu0 %v1169
  %v1171 = vpop.xlane.xlu0 %1170
  %v1172 = vsel %vm163, %v1151, 0.0
  %1173 = vadd.xlane.f32.xlu0 %v1172
  %v1174 = vpop.xlane.xlu0 %1173
  %v1175 = vsel %vm163, %v1152, 0.0
  %1176 = vadd.xlane.f32.xlu0 %v1175
  %v1177 = vpop.xlane.xlu0 %1176
  %v1178 = vmul.f32 %v1162, %v182
  %v1179 = vmul.f32 %v1165, %v182
  %v1180 = vmul.f32 %v1168, %v182
  %v1181 = vmul.f32 %v1171, %v182
  %v1182 = vmul.f32 %v1174, %v182
  %v1183 = vmul.f32 %v1177, %v182
  %v1184 = vsub.f32 %v1147, %v1178
  %v1185 = vsub.f32 %v1148, %v1179
  %v1186 = vsub.f32 %v1149, %v1180
  %v1187 = vsub.f32 %v1150, %v1181
  %v1188 = vsub.f32 %v1151, %v1182
  %v1189 = vsub.f32 %v1152, %v1183
  %v1190 = vmul.f32 %v1184, %v1184
  %v1191 = vmul.f32 %v1185, %v1185
  %v1192 = vmul.f32 %v1186, %v1186
  %v1193 = vmul.f32 %v1187, %v1187
  %v1194 = vmul.f32 %v1188, %v1188
  %v1195 = vmul.f32 %v1189, %v1189
  %v1196 = vsel %vm163, %v1190, 0.0
  %1197 = vadd.xlane.f32.xlu0 %v1196
  %v1198 = vpop.xlane.xlu0 %1197
  %v1199 = vsel %vm163, %v1191, 0.0
  %1200 = vadd.xlane.f32.xlu0 %v1199
  %v1201 = vpop.xlane.xlu0 %1200
  %v1202 = vsel %vm163, %v1192, 0.0
  %1203 = vadd.xlane.f32.xlu0 %v1202
  %v1204 = vpop.xlane.xlu0 %1203
  %v1205 = vsel %vm163, %v1193, 0.0
  %1206 = vadd.xlane.f32.xlu0 %v1205
  %v1207 = vpop.xlane.xlu0 %1206
  %v1208 = vsel %vm163, %v1194, 0.0
  %1209 = vadd.xlane.f32.xlu0 %v1208
  %v1210 = vpop.xlane.xlu0 %1209
  %v1211 = vsel %vm163, %v1195, 0.0
  %1212 = vadd.xlane.f32.xlu0 %v1211
  %v1213 = vpop.xlane.xlu0 %1212
  %v1214 = vmul.f32 %v1198, %v182
  %v1215 = vmul.f32 %v1201, %v182
  %v1216 = vmul.f32 %v1204, %v182
  %v1217 = vmul.f32 %v1207, %v182
  %v1218 = vmul.f32 %v1210, %v182
  %v1219 = vmul.f32 %v1213, %v182
  %v1220 = vadd.f32 %v1214, 1e-05
  %v1221 = vadd.f32 %v1215, 1e-05
  %v1222 = vadd.f32 %v1216, 1e-05
  %v1223 = vadd.f32 %v1217, 1e-05
  %v1224 = vadd.f32 %v1218, 1e-05
  %v1225 = vadd.f32 %v1219, 1e-05
  %v1226 = vrsqrt.pop %v1220
  %v1227 = vrsqrt.pop %v1221
  %v1228 = vrsqrt.pop %v1222
  %v1229 = vrsqrt.pop %v1223
  %v1230 = vrsqrt.pop %v1224
  %v1231 = vrsqrt.pop %v1225
  %v1232 = vmul.f32 %v1184, %v1226
  %v1233 = vmul.f32 %v1185, %v1227
  %v1234 = vmul.f32 %v1186, %v1228
  %v1235 = vmul.f32 %v1187, %v1229
  %v1236 = vmul.f32 %v1188, %v1230
  %v1237 = vmul.f32 %v1189, %v1231
  %v1238 = vlaneseq
  %v1239 = vshrl.u32 %v1238, 7
  %v1240 = vsub.s32 0, %v1239
  %v1241 = vrot.slane %v1153, %v1240
  %v1242 = vmul.f32 %v1232, %v1241
  %v1243 = vmul.f32 %v1233, %v1241
  %v1244 = vmul.f32 %v1234, %v1241
  %v1245 = vmul.f32 %v1235, %v1241
  %v1246 = vmul.f32 %v1236, %v1241
  %v1247 = vmul.f32 %v1237, %v1241
  %v1248 = vlaneseq
  %v1249 = vshrl.u32 %v1248, 7
  %v1250 = vsub.s32 0, %v1249
  %v1251 = vrot.slane %v1154, %v1250
  %v1252 = vadd.f32 %v1242, %v1251
  %v1253 = vadd.f32 %v1243, %v1251
  %v1254 = vadd.f32 %v1244, %v1251
  %v1255 = vadd.f32 %v1245, %v1251
  %v1256 = vadd.f32 %v1246, %v1251
  %v1257 = vadd.f32 %v1247, %v1251
  %v1258 = vpack.c.bf16 %v1253, %v1252
  %v1259 = vpack.c.bf16 %v1255, %v1254
  %v1260 = vpack.c.bf16 %v1257, %v1256
  %s1261 = scalar_lea.vmem %s3, 16
  %v1262 = vld [vmem:[%s1261] sm:$0xf]
  %v1263 = vld [vmem:[%s1261 + $0x4] sm:$0xf]
  %v1264 = vld [vmem:[%s1261 + $0x8] sm:$0xf]
  %v1265 = vld [vmem:[%s1261 + $0xc] sm:$0xf]
  %v1266 = vlaneseq
  %v1267 = vshrl.u32 %v1266, 7
  %v1268 = vsub.s32 0, %v1267
  %v1269 = vrot.slane %v1157, %v1268
  %v1274 = vunpack.c.l.b16 %v1262
  %v1275 = vunpack.c.l.b16 %v1263
  %v1276 = vunpack.c.l.b16 %v1264
  %v1277 = vunpack.c.l.b16 %v1265
  %v1278 = vpack.c.b16 %v1275, %v1274
  %v1279 = vpack.c.b16 %v1277, %v1276
  %v1283 = vsel %vm163, %v1258, 0
  %v1286 = vsel %vm163, %v1259, 0
  %v1289 = vsel %vm163, %v1260, 0
  %1291 = vmatprep.subr.bf16.mxu0 0
  %1292 = vmatpush1.bf16.msra.mxu0 %v1278
  %1293 = vmatprep.subr.bf16.mxu0 0
  %1294 = vmatpush1.bf16.msra.mxu0 %v1279
  %1295 = vmatprep.subr.bf16.mxu0 0
  %1296 = vmatpush1.bf16.msra.mxu0 0
  %1297 = vmatprep.subr.bf16.mxu0 0
  %1298 = vmatpush1.bf16.msra.mxu0 0
  %1299 = vmatprep.subr.bf16.mxu0 0
  %1300 = vmatpush1.bf16.msra.mxu0 0
  %1301 = vmatprep.subr.bf16.mxu0 0
  %1302 = vmatpush1.bf16.msra.mxu0 0
  %1303 = vmatprep.subr.bf16.mxu0 0
  %1304 = vmatpush1.bf16.msra.mxu0 0
  %1305 = vmatprep.subr.bf16.mxu0 0
  %1306 = vmatpush1.bf16.msra.mxu0 0
  %1307 = vmatprep.subr.bf16.mxu0 0
  %1308 = vmatpush1.bf16.msra.mxu0 0
  %1309 = vmatprep.subr.bf16.mxu0 0
  %1310 = vmatpush1.bf16.msra.mxu0 0
  %1311 = vmatprep.subr.bf16.mxu0 0
  %1312 = vmatpush1.bf16.msra.mxu0 0
  %1313 = vmatprep.subr.bf16.mxu0 0
  %1314 = vmatpush1.bf16.msra.mxu0 0
  %1315 = vmatprep.subr.bf16.mxu0 0
  %1316 = vmatpush1.bf16.msra.mxu0 0
  %1317 = vmatprep.subr.bf16.mxu0 0
  %1318 = vmatpush1.bf16.msra.mxu0 0
  %1319 = vmatprep.subr.bf16.mxu0 0
  %1320 = vmatpush1.bf16.msra.mxu0 0
  %1321 = vmatprep.subr.bf16.mxu0 0
  %1322 = vmatpush1.bf16.msra.mxu0 0
  %1323 = vmatprep.mubr.bf16.mxu0 0
  %1324 = vmatmul.mubr.bf16.gmra.mrb[0].mxu0 %v1283
  %v1325 = vpop.f32.mrb[0].mxu0
  %v1326 = vadd.f32 %v1269, %v1325
  %v1327 = vpop.f32.mrb[0].mxu0
  %v1328 = vpop.f32.mrb[0].mxu0
  %v1329 = vadd.f32 %v1269, %v1328
  %v1330 = vpop.f32.mrb[0].mxu0
  %1331 = vmatprep.mubr.bf16.mxu0 0
  %1332 = vmatmul.mubr.bf16.gmra.mrb[0].mxu0 %v1286
  %v1333 = vpop.f32.mrb[0].mxu0
  %v1334 = vadd.f32 %v1269, %v1333
  %v1335 = vpop.f32.mrb[0].mxu0
  %v1336 = vpop.f32.mrb[0].mxu0
  %v1337 = vadd.f32 %v1269, %v1336
  %v1338 = vpop.f32.mrb[0].mxu0
  %1339 = vmatprep.mubr.bf16.mxu0 0
  %1340 = vmatmul.mubr.bf16.gmra.mrb[0].mxu0 %v1289
  %v1341 = vpop.f32.mrb[0].mxu0
  %v1342 = vadd.f32 %v1269, %v1341
  %v1343 = vpop.f32.mrb[0].mxu0
  %v1344 = vpop.f32.mrb[0].mxu0
  %v1345 = vadd.f32 %v1269, %v1344
  %v1346 = vpop.f32.mrb[0].mxu0
  %1347 = vdwg.mxu0
  %1354 = vrot.lane.b32.xlu0 %v1326, 96
  %v1355 = vpop.permute.xlu0 %1354
  %1356 = vrot.lane.b32.xlu0 %v1329, 96
  %v1357 = vpop.permute.xlu0 %1356
  %1358 = vrot.lane.b32.xlu0 %v1334, 96
  %v1359 = vpop.permute.xlu0 %1358
  %1360 = vrot.lane.b32.xlu0 %v1337, 96
  %v1361 = vpop.permute.xlu0 %1360
  %1362 = vrot.lane.b32.xlu0 %v1342, 96
  %v1363 = vpop.permute.xlu0 %1362
  %1364 = vrot.lane.b32.xlu0 %v1345, 96
  %v1365 = vpop.permute.xlu0 %1364
  %v1372 = vpack.c.bf16 %v1329, %v1326
  %v1373 = vpack.c.bf16 %v1337, %v1334
  %v1374 = vpack.c.bf16 %v1345, %v1342
  %v1375 = vpack.c.bf16 %v1357, %v1355
  %v1376 = vpack.c.bf16 %v1361, %v1359
  %v1377 = vpack.c.bf16 %v1365, %v1363
  %1381 = vrot.lane.b32.xlu0 %v1372, 64
  %v1382 = vpop.permute.xlu0 %1381
  %1383 = vrot.lane.b32.xlu0 %v1373, 64
  %v1384 = vpop.permute.xlu0 %1383
  %1385 = vrot.lane.b32.xlu0 %v1374, 64
  %v1386 = vpop.permute.xlu0 %1385
  %v1388 = vsel %vm163, %v1372, 0
  %v1391 = vsel %vm163, %v1373, 0
  %v1394 = vsel %vm163, %v1374, 0
  %v1397 = vsel %vm163, %v1375, 0
  %v1400 = vsel %vm163, %v1376, 0
  %v1403 = vsel %vm163, %v1377, 0
  %v1406 = vsel %vm163, %v1382, 0
  %v1409 = vsel %vm163, %v1384, 0
  %v1412 = vsel %vm163, %v1386, 0
  %1414 = vmatprep.subr.bf16.mxu0 0
  %1415 = vmatpush1.bf16.xpose.msra.mxu0 %v1406
  %1416 = vmatprep.subr.bf16.mxu0 0
  %1417 = vmatpush1.bf16.xpose.msra.mxu0 %v1409
  %1418 = vmatprep.subr.bf16.mxu0 0
  %1419 = vmatpush1.bf16.xpose.msra.mxu0 %v1412
  %1420 = vmatprep.subr.bf16.mxu0 0
  %1421 = vmatpush1.bf16.xpose.msra.mxu0 0
  %1422 = vmatprep.subr.bf16.mxu0 0
  %1423 = vmatpush1.bf16.xpose.msra.mxu0 0
  %1424 = vmatprep.subr.bf16.mxu0 0
  %1425 = vmatpush1.bf16.xpose.msra.mxu0 0
  %1426 = vmatprep.subr.bf16.mxu0 0
  %1427 = vmatpush1.bf16.xpose.msra.mxu0 0
  %1428 = vmatprep.subr.bf16.mxu0 0
  %1429 = vmatpush1.bf16.xpose.msra.mxu0 0
  %1430 = vmatprep.subr.bf16.mxu0 0
  %1431 = vmatpush1.bf16.xpose.msra.mxu0 0
  %1432 = vmatprep.subr.bf16.mxu0 0
  %1433 = vmatpush1.bf16.xpose.msra.mxu0 0
  %1434 = vmatprep.subr.bf16.mxu0 0
  %1435 = vmatpush1.bf16.xpose.msra.mxu0 0
  %1436 = vmatprep.subr.bf16.mxu0 0
  %1437 = vmatpush1.bf16.xpose.msra.mxu0 0
  %1438 = vmatprep.subr.bf16.mxu0 0
  %1439 = vmatpush1.bf16.xpose.msra.mxu0 0
  %1440 = vmatprep.subr.bf16.mxu0 0
  %1441 = vmatpush1.bf16.xpose.msra.mxu0 0
  %1442 = vmatprep.subr.bf16.mxu0 0
  %1443 = vmatpush1.bf16.xpose.msra.mxu0 0
  %1444 = vmatprep.subr.bf16.mxu0 0
  %1445 = vmatpush1.bf16.xpose.msra.mxu0 0
  %1446 = vmatprep.mubr.bf16.mxu0 0
  %1447 = vmatmul.mubr.bf16.gmra.mrb[0].mxu0 %v1388
  %v1448 = vpop.f32.mrb[0].mxu0
  %v1449 = vadd.f32 %v33, %v1448
  %v1450 = vpop.f32.mrb[0].mxu0
  %v1451 = vpop.f32.mrb[0].mxu0
  %v1452 = vadd.f32 %v34, %v1451
  %v1453 = vpop.f32.mrb[0].mxu0
  %1454 = vmatprep.mubr.bf16.mxu0 0
  %1455 = vmatmul.mubr.bf16.gmra.mrb[0].mxu0 %v1391
  %v1456 = vpop.f32.mrb[0].mxu0
  %v1457 = vadd.f32 %v35, %v1456
  %v1458 = vpop.f32.mrb[0].mxu0
  %v1459 = vpop.f32.mrb[0].mxu0
  %v1460 = vadd.f32 %v36, %v1459
  %v1461 = vpop.f32.mrb[0].mxu0
  %1462 = vmatprep.mubr.bf16.mxu0 0
  %1463 = vmatmul.mubr.bf16.gmra.mrb[0].mxu0 %v1394
  %v1464 = vpop.f32.mrb[0].mxu0
  %v1465 = vadd.f32 %v37, %v1464
  %v1466 = vpop.f32.mrb[0].mxu0
  %v1467 = vpop.f32.mrb[0].mxu0
  %v1468 = vadd.f32 %v38, %v1467
  %v1469 = vpop.f32.mrb[0].mxu0
  %1470 = vmatprep.mubr.bf16.mxu0 0
  %1471 = vmatmul.mubr.bf16.gmra.mrb[0].mxu0 %v1397
  %v1472 = vpop.f32.mrb[0].mxu0
  %v1473 = vadd.f32 %v39, %v1472
  %v1474 = vpop.f32.mrb[0].mxu0
  %v1475 = vpop.f32.mrb[0].mxu0
  %v1476 = vadd.f32 %v40, %v1475
  %v1477 = vpop.f32.mrb[0].mxu0
  %1478 = vmatprep.mubr.bf16.mxu0 0
  %1479 = vmatmul.mubr.bf16.gmra.mrb[0].mxu0 %v1400
  %v1480 = vpop.f32.mrb[0].mxu0
  %v1481 = vadd.f32 %v41, %v1480
  %v1482 = vpop.f32.mrb[0].mxu0
  %v1483 = vpop.f32.mrb[0].mxu0
  %v1484 = vadd.f32 %v42, %v1483
  %v1485 = vpop.f32.mrb[0].mxu0
  %1486 = vmatprep.mubr.bf16.mxu0 0
  %1487 = vmatmul.mubr.bf16.gmra.mrb[0].mxu0 %v1403
  %v1488 = vpop.f32.mrb[0].mxu0
  %v1489 = vadd.f32 %v43, %v1488
  %v1490 = vpop.f32.mrb[0].mxu0
  %v1491 = vpop.f32.mrb[0].mxu0
  %v1492 = vadd.f32 %v44, %v1491
  %v1493 = vpop.f32.mrb[0].mxu0
  %1494 = vdwg.mxu0
  %v1495 = vsel %vm499, %v1449, -inf
  %1496 = vmax.xlane.f32.xlu0 %v1495
  %v1497 = vpop.xlane.xlu0 %1496
  %v1498 = vsel %vm499, %v1452, -inf
  %1499 = vmax.xlane.f32.xlu0 %v1498
  %v1500 = vpop.xlane.xlu0 %1499
  %v1501 = vsel %vm499, %v1457, -inf
  %1502 = vmax.xlane.f32.xlu0 %v1501
  %v1503 = vpop.xlane.xlu0 %1502
  %v1504 = vsel %vm499, %v1460, -inf
  %1505 = vmax.xlane.f32.xlu0 %v1504
  %v1506 = vpop.xlane.xlu0 %1505
  %v1507 = vsel %vm499, %v1465, -inf
  %1508 = vmax.xlane.f32.xlu0 %v1507
  %v1509 = vpop.xlane.xlu0 %1508
  %v1510 = vsel %vm499, %v1468, -inf
  %1511 = vmax.xlane.f32.xlu0 %v1510
  %v1512 = vpop.xlane.xlu0 %1511
  %v1513 = vsel %vm499, %v1473, -inf
  %1514 = vmax.xlane.f32.xlu0 %v1513
  %v1515 = vpop.xlane.xlu0 %1514
  %v1516 = vsel %vm499, %v1476, -inf
  %1517 = vmax.xlane.f32.xlu0 %v1516
  %v1518 = vpop.xlane.xlu0 %1517
  %v1519 = vsel %vm499, %v1481, -inf
  %1520 = vmax.xlane.f32.xlu0 %v1519
  %v1521 = vpop.xlane.xlu0 %1520
  %v1522 = vsel %vm499, %v1484, -inf
  %1523 = vmax.xlane.f32.xlu0 %v1522
  %v1524 = vpop.xlane.xlu0 %1523
  %v1525 = vsel %vm499, %v1489, -inf
  %1526 = vmax.xlane.f32.xlu0 %v1525
  %v1527 = vpop.xlane.xlu0 %1526
  %v1528 = vsel %vm499, %v1492, -inf
  %1529 = vmax.xlane.f32.xlu0 %v1528
  %v1530 = vpop.xlane.xlu0 %1529
  %v1531 = vsub.f32 %v1449, %v1497
  %v1532 = vsub.f32 %v1452, %v1500
  %v1533 = vsub.f32 %v1457, %v1503
  %v1534 = vsub.f32 %v1460, %v1506
  %v1535 = vsub.f32 %v1465, %v1509
  %v1536 = vsub.f32 %v1468, %v1512
  %v1537 = vsub.f32 %v1473, %v1515
  %v1538 = vsub.f32 %v1476, %v1518
  %v1539 = vsub.f32 %v1481, %v1521
  %v1540 = vsub.f32 %v1484, %v1524
  %v1541 = vsub.f32 %v1489, %v1527
  %v1542 = vsub.f32 %v1492, %v1530
  %v1543 = vmul.f32 %v1531, 1.442695
  %v1544 = vpow.pop %v1543
  %v1545 = vmul.f32 %v1532, 1.442695
  %v1546 = vpow.pop %v1545
  %v1547 = vmul.f32 %v1533, 1.442695
  %v1548 = vpow.pop %v1547
  %v1549 = vmul.f32 %v1534, 1.442695
  %v1550 = vpow.pop %v1549
  %v1551 = vmul.f32 %v1535, 1.442695
  %v1552 = vpow.pop %v1551
  %v1553 = vmul.f32 %v1536, 1.442695
  %v1554 = vpow.pop %v1553
  %v1555 = vmul.f32 %v1537, 1.442695
  %v1556 = vpow.pop %v1555
  %v1557 = vmul.f32 %v1538, 1.442695
  %v1558 = vpow.pop %v1557
  %v1559 = vmul.f32 %v1539, 1.442695
  %v1560 = vpow.pop %v1559
  %v1561 = vmul.f32 %v1540, 1.442695
  %v1562 = vpow.pop %v1561
  %v1563 = vmul.f32 %v1541, 1.442695
  %v1564 = vpow.pop %v1563
  %v1565 = vmul.f32 %v1542, 1.442695
  %v1566 = vpow.pop %v1565
  %v1567 = vsel %vm499, %v1544, 0.0
  %1568 = vadd.xlane.f32.xlu0 %v1567
  %v1569 = vpop.xlane.xlu0 %1568
  %v1570 = vsel %vm499, %v1546, 0.0
  %1571 = vadd.xlane.f32.xlu0 %v1570
  %v1572 = vpop.xlane.xlu0 %1571
  %v1573 = vsel %vm499, %v1548, 0.0
  %1574 = vadd.xlane.f32.xlu0 %v1573
  %v1575 = vpop.xlane.xlu0 %1574
  %v1576 = vsel %vm499, %v1550, 0.0
  %1577 = vadd.xlane.f32.xlu0 %v1576
  %v1578 = vpop.xlane.xlu0 %1577
  %v1579 = vsel %vm499, %v1552, 0.0
  %1580 = vadd.xlane.f32.xlu0 %v1579
  %v1581 = vpop.xlane.xlu0 %1580
  %v1582 = vsel %vm499, %v1554, 0.0
  %1583 = vadd.xlane.f32.xlu0 %v1582
  %v1584 = vpop.xlane.xlu0 %1583
  %v1585 = vsel %vm499, %v1556, 0.0
  %1586 = vadd.xlane.f32.xlu0 %v1585
  %v1587 = vpop.xlane.xlu0 %1586
  %v1588 = vsel %vm499, %v1558, 0.0
  %1589 = vadd.xlane.f32.xlu0 %v1588
  %v1590 = vpop.xlane.xlu0 %1589
  %v1591 = vsel %vm499, %v1560, 0.0
  %1592 = vadd.xlane.f32.xlu0 %v1591
  %v1593 = vpop.xlane.xlu0 %1592
  %v1594 = vsel %vm499, %v1562, 0.0
  %1595 = vadd.xlane.f32.xlu0 %v1594
  %v1596 = vpop.xlane.xlu0 %1595
  %v1597 = vsel %vm499, %v1564, 0.0
  %1598 = vadd.xlane.f32.xlu0 %v1597
  %v1599 = vpop.xlane.xlu0 %1598
  %v1600 = vsel %vm499, %v1566, 0.0
  %1601 = vadd.xlane.f32.xlu0 %v1600
  %v1602 = vpop.xlane.xlu0 %1601
  %v1603 = vrcp.pop %v1569
  %v1604 = vrcp.pop %v1572
  %v1605 = vrcp.pop %v1575
  %v1606 = vrcp.pop %v1578
  %v1607 = vrcp.pop %v1581
  %v1608 = vrcp.pop %v1584
  %v1609 = vrcp.pop %v1587
  %v1610 = vrcp.pop %v1590
  %v1611 = vrcp.pop %v1593
  %v1612 = vrcp.pop %v1596
  %v1613 = vrcp.pop %v1599
  %v1614 = vrcp.pop %v1602
  %v1615 = vmul.f32 %v1544, %v1603
  %v1616 = vmul.f32 %v1546, %v1604
  %v1617 = vmul.f32 %v1548, %v1605
  %v1618 = vmul.f32 %v1550, %v1606
  %v1619 = vmul.f32 %v1552, %v1607
  %v1620 = vmul.f32 %v1554, %v1608
  %v1621 = vmul.f32 %v1556, %v1609
  %v1622 = vmul.f32 %v1558, %v1610
  %v1623 = vmul.f32 %v1560, %v1611
  %v1624 = vmul.f32 %v1562, %v1612
  %v1625 = vmul.f32 %v1564, %v1613
  %v1626 = vmul.f32 %v1566, %v1614
  %v1627 = vpack.c.bf16 %v1616, %v1615
  %v1628 = vpack.c.bf16 %v1618, %v1617
  %v1629 = vpack.c.bf16 %v1620, %v1619
  %v1630 = vpack.c.bf16 %v1622, %v1621
  %v1631 = vpack.c.bf16 %v1624, %v1623
  %v1632 = vpack.c.bf16 %v1626, %v1625
  %1633 = vrot.lane.b32.xlu0 %v1372, 32
  %v1634 = vpop.permute.xlu0 %1633
  %1635 = vrot.lane.b32.xlu0 %v1373, 32
  %v1636 = vpop.permute.xlu0 %1635
  %1637 = vrot.lane.b32.xlu0 %v1374, 32
  %v1638 = vpop.permute.xlu0 %1637
  %v1643 = vsel %vm499, %v1627, 0
  %v1646 = vsel %vm499, %v1628, 0
  %v1649 = vsel %vm499, %v1629, 0
  %v1652 = vsel %vm499, %v1630, 0
  %v1655 = vsel %vm499, %v1631, 0
  %v1658 = vsel %vm499, %v1632, 0
  %1660 = vmatprep.subr.bf16.mxu0 0
  %1661 = vmatpush1.bf16.msra.mxu0 %v1634
  %1662 = vmatprep.subr.bf16.mxu0 0
  %1663 = vmatpush1.bf16.msra.mxu0 %v1636
  %1664 = vmatprep.subr.bf16.mxu0 0
  %1665 = vmatpush1.bf16.msra.mxu0 %v1638
  %1666 = vmatprep.subr.bf16.mxu0 0
  %1667 = vmatpush1.bf16.msra.mxu0 0
  %1668 = vmatprep.subr.bf16.mxu0 0
  %1669 = vmatpush1.bf16.msra.mxu0 0
  %1670 = vmatprep.subr.bf16.mxu0 0
  %1671 = vmatpush1.bf16.msra.mxu0 0
  %1672 = vmatprep.subr.bf16.mxu0 0
  %1673 = vmatpush1.bf16.msra.mxu0 0
  %1674 = vmatprep.subr.bf16.mxu0 0
  %1675 = vmatpush1.bf16.msra.mxu0 0
  %1676 = vmatprep.subr.bf16.mxu0 0
  %1677 = vmatpush1.bf16.msra.mxu0 0
  %1678 = vmatprep.subr.bf16.mxu0 0
  %1679 = vmatpush1.bf16.msra.mxu0 0
  %1680 = vmatprep.subr.bf16.mxu0 0
  %1681 = vmatpush1.bf16.msra.mxu0 0
  %1682 = vmatprep.subr.bf16.mxu0 0
  %1683 = vmatpush1.bf16.msra.mxu0 0
  %1684 = vmatprep.subr.bf16.mxu0 0
  %1685 = vmatpush1.bf16.msra.mxu0 0
  %1686 = vmatprep.subr.bf16.mxu0 0
  %1687 = vmatpush1.bf16.msra.mxu0 0
  %1688 = vmatprep.subr.bf16.mxu0 0
  %1689 = vmatpush1.bf16.msra.mxu0 0
  %1690 = vmatprep.subr.bf16.mxu0 0
  %1691 = vmatpush1.bf16.msra.mxu0 0
  %1692 = vmatprep.mubr.bf16.mxu0 0
  %1693 = vmatmul.mubr.bf16.gmra.mrb[0].mxu0 %v1643
  %v1694 = vpop.f32.mrb[0].mxu0
  %v1695 = vadd.f32 0.0, %v1694
  %v1696 = vpop.f32.mrb[0].mxu0
  %v1697 = vpop.f32.mrb[0].mxu0
  %v1698 = vadd.f32 0.0, %v1697
  %v1699 = vpop.f32.mrb[0].mxu0
  %1700 = vmatprep.mubr.bf16.mxu0 0
  %1701 = vmatmul.mubr.bf16.gmra.mrb[0].mxu0 %v1646
  %v1702 = vpop.f32.mrb[0].mxu0
  %v1703 = vadd.f32 0.0, %v1702
  %v1704 = vpop.f32.mrb[0].mxu0
  %v1705 = vpop.f32.mrb[0].mxu0
  %v1706 = vadd.f32 0.0, %v1705
  %v1707 = vpop.f32.mrb[0].mxu0
  %1708 = vmatprep.mubr.bf16.mxu0 0
  %1709 = vmatmul.mubr.bf16.gmra.mrb[0].mxu0 %v1649
  %v1710 = vpop.f32.mrb[0].mxu0
  %v1711 = vadd.f32 0.0, %v1710
  %v1712 = vpop.f32.mrb[0].mxu0
  %v1713 = vpop.f32.mrb[0].mxu0
  %v1714 = vadd.f32 0.0, %v1713
  %v1715 = vpop.f32.mrb[0].mxu0
  %1716 = vmatprep.mubr.bf16.mxu0 0
  %1717 = vmatmul.mubr.bf16.gmra.mrb[0].mxu0 %v1652
  %v1718 = vpop.f32.mrb[0].mxu0
  %v1719 = vadd.f32 0.0, %v1718
  %v1720 = vpop.f32.mrb[0].mxu0
  %v1721 = vpop.f32.mrb[0].mxu0
  %v1722 = vadd.f32 0.0, %v1721
  %v1723 = vpop.f32.mrb[0].mxu0
  %1724 = vmatprep.mubr.bf16.mxu0 0
  %1725 = vmatmul.mubr.bf16.gmra.mrb[0].mxu0 %v1655
  %v1726 = vpop.f32.mrb[0].mxu0
  %v1727 = vadd.f32 0.0, %v1726
  %v1728 = vpop.f32.mrb[0].mxu0
  %v1729 = vpop.f32.mrb[0].mxu0
  %v1730 = vadd.f32 0.0, %v1729
  %v1731 = vpop.f32.mrb[0].mxu0
  %1732 = vmatprep.mubr.bf16.mxu0 0
  %1733 = vmatmul.mubr.bf16.gmra.mrb[0].mxu0 %v1658
  %v1734 = vpop.f32.mrb[0].mxu0
  %v1735 = vadd.f32 0.0, %v1734
  %v1736 = vpop.f32.mrb[0].mxu0
  %v1737 = vpop.f32.mrb[0].mxu0
  %v1738 = vadd.f32 0.0, %v1737
  %v1739 = vpop.f32.mrb[0].mxu0
  %1740 = vdwg.mxu0
  %v1741 = vmul.f32 %v1695, %v749
  %v1742 = vmul.f32 %v1698, %v749
  %v1743 = vmul.f32 %v1703, %v749
  %v1744 = vmul.f32 %v1706, %v749
  %v1745 = vmul.f32 %v1711, %v749
  %v1746 = vmul.f32 %v1714, %v749
  %v1747 = vadd.f32 %v1147, %v1741
  %v1748 = vadd.f32 %v1148, %v1742
  %v1749 = vadd.f32 %v1149, %v1743
  %v1750 = vadd.f32 %v1150, %v1744
  %v1751 = vadd.f32 %v1151, %v1745
  %v1752 = vadd.f32 %v1152, %v1746
  %v1753 = vmul.f32 %v1719, %v765
  %v1754 = vmul.f32 %v1722, %v765
  %v1755 = vmul.f32 %v1727, %v765
  %v1756 = vmul.f32 %v1730, %v765
  %v1757 = vmul.f32 %v1735, %v765
  %v1758 = vmul.f32 %v1738, %v765
  %v1759 = vadd.f32 %v1747, %v1753
  %v1760 = vadd.f32 %v1748, %v1754
  %v1761 = vadd.f32 %v1749, %v1755
  %v1762 = vadd.f32 %v1750, %v1756
  %v1763 = vadd.f32 %v1751, %v1757
  %v1764 = vadd.f32 %v1752, %v1758
  %v1765 = vsel %vm163, %v1759, 0.0
  %1766 = vadd.xlane.f32.xlu0 %v1765
  %v1767 = vpop.xlane.xlu0 %1766
  %v1768 = vsel %vm163, %v1760, 0.0
  %1769 = vadd.xlane.f32.xlu0 %v1768
  %v1770 = vpop.xlane.xlu0 %1769
  %v1771 = vsel %vm163, %v1761, 0.0
  %1772 = vadd.xlane.f32.xlu0 %v1771
  %v1773 = vpop.xlane.xlu0 %1772
  %v1774 = vsel %vm163, %v1762, 0.0
  %1775 = vadd.xlane.f32.xlu0 %v1774
  %v1776 = vpop.xlane.xlu0 %1775
  %v1777 = vsel %vm163, %v1763, 0.0
  %1778 = vadd.xlane.f32.xlu0 %v1777
  %v1779 = vpop.xlane.xlu0 %1778
  %v1780 = vsel %vm163, %v1764, 0.0
  %1781 = vadd.xlane.f32.xlu0 %v1780
  %v1782 = vpop.xlane.xlu0 %1781
  %v1783 = vmul.f32 %v1767, %v182
  %v1784 = vmul.f32 %v1770, %v182
  %v1785 = vmul.f32 %v1773, %v182
  %v1786 = vmul.f32 %v1776, %v182
  %v1787 = vmul.f32 %v1779, %v182
  %v1788 = vmul.f32 %v1782, %v182
  %v1789 = vsub.f32 %v1759, %v1783
  %v1790 = vsub.f32 %v1760, %v1784
  %v1791 = vsub.f32 %v1761, %v1785
  %v1792 = vsub.f32 %v1762, %v1786
  %v1793 = vsub.f32 %v1763, %v1787
  %v1794 = vsub.f32 %v1764, %v1788
  %v1795 = vmul.f32 %v1789, %v1789
  %v1796 = vmul.f32 %v1790, %v1790
  %v1797 = vmul.f32 %v1791, %v1791
  %v1798 = vmul.f32 %v1792, %v1792
  %v1799 = vmul.f32 %v1793, %v1793
  %v1800 = vmul.f32 %v1794, %v1794
  %v1801 = vsel %vm163, %v1795, 0.0
  %1802 = vadd.xlane.f32.xlu0 %v1801
  %v1803 = vpop.xlane.xlu0 %1802
  %v1804 = vsel %vm163, %v1796, 0.0
  %1805 = vadd.xlane.f32.xlu0 %v1804
  %v1806 = vpop.xlane.xlu0 %1805
  %v1807 = vsel %vm163, %v1797, 0.0
  %1808 = vadd.xlane.f32.xlu0 %v1807
  %v1809 = vpop.xlane.xlu0 %1808
  %v1810 = vsel %vm163, %v1798, 0.0
  %1811 = vadd.xlane.f32.xlu0 %v1810
  %v1812 = vpop.xlane.xlu0 %1811
  %v1813 = vsel %vm163, %v1799, 0.0
  %1814 = vadd.xlane.f32.xlu0 %v1813
  %v1815 = vpop.xlane.xlu0 %1814
  %v1816 = vsel %vm163, %v1800, 0.0
  %1817 = vadd.xlane.f32.xlu0 %v1816
  %v1818 = vpop.xlane.xlu0 %1817
  %v1819 = vmul.f32 %v1803, %v182
  %v1820 = vmul.f32 %v1806, %v182
  %v1821 = vmul.f32 %v1809, %v182
  %v1822 = vmul.f32 %v1812, %v182
  %v1823 = vmul.f32 %v1815, %v182
  %v1824 = vmul.f32 %v1818, %v182
  %v1825 = vadd.f32 %v1819, 1e-05
  %v1826 = vadd.f32 %v1820, 1e-05
  %v1827 = vadd.f32 %v1821, 1e-05
  %v1828 = vadd.f32 %v1822, 1e-05
  %v1829 = vadd.f32 %v1823, 1e-05
  %v1830 = vadd.f32 %v1824, 1e-05
  %v1831 = vrsqrt.pop %v1825
  %v1832 = vrsqrt.pop %v1826
  %v1833 = vrsqrt.pop %v1827
  %v1834 = vrsqrt.pop %v1828
  %v1835 = vrsqrt.pop %v1829
  %v1836 = vrsqrt.pop %v1830
  %v1837 = vmul.f32 %v1789, %v1831
  %v1838 = vmul.f32 %v1790, %v1832
  %v1839 = vmul.f32 %v1791, %v1833
  %v1840 = vmul.f32 %v1792, %v1834
  %v1841 = vmul.f32 %v1793, %v1835
  %v1842 = vmul.f32 %v1794, %v1836
  %v1843 = vlaneseq
  %v1844 = vshrl.u32 %v1843, 7
  %v1845 = vsub.s32 0, %v1844
  %v1846 = vrot.slane %v1155, %v1845
  %v1847 = vmul.f32 %v1837, %v1846
  %v1848 = vmul.f32 %v1838, %v1846
  %v1849 = vmul.f32 %v1839, %v1846
  %v1850 = vmul.f32 %v1840, %v1846
  %v1851 = vmul.f32 %v1841, %v1846
  %v1852 = vmul.f32 %v1842, %v1846
  %v1853 = vlaneseq
  %v1854 = vshrl.u32 %v1853, 7
  %v1855 = vsub.s32 0, %v1854
  %v1856 = vrot.slane %v1156, %v1855
  %v1857 = vadd.f32 %v1847, %v1856
  %v1858 = vadd.f32 %v1848, %v1856
  %v1859 = vadd.f32 %v1849, %v1856
  %v1860 = vadd.f32 %v1850, %v1856
  %v1861 = vadd.f32 %v1851, %v1856
  %v1862 = vadd.f32 %v1852, %v1856
  %v1863 = vpack.c.bf16 %v1858, %v1857
  %v1864 = vpack.c.bf16 %v1860, %v1859
  %v1865 = vpack.c.bf16 %v1862, %v1861
  %s1866 = scalar_lea.vmem %s4, 16
  %v1867 = vld [vmem:[%s1866] sm:$0xf]
  %v1868 = vld [vmem:[%s1866 + $0x4] sm:$0xf]
  %v1869 = vld [vmem:[%s1866 + $0x8] sm:$0xf]
  %v1870 = vld [vmem:[%s1866 + $0xc] sm:$0xf]
  %v1871 = vlaneseq
  %v1872 = vshrl.u32 %v1871, 7
  %v1873 = vsub.s32 0, %v1872
  %v1874 = vrot.slane %v1158, %v1873
  %v1879 = vunpack.c.l.b16 %v1867
  %v1880 = vunpack.c.l.b16 %v1868
  %v1881 = vunpack.c.l.b16 %v1869
  %v1882 = vunpack.c.l.b16 %v1870
  %v1883 = vpack.c.b16 %v1880, %v1879
  %v1884 = vpack.c.b16 %v1882, %v1881
  %v1888 = vsel %vm163, %v1863, 0
  %v1891 = vsel %vm163, %v1864, 0
  %v1894 = vsel %vm163, %v1865, 0
  %1896 = vmatprep.subr.bf16.mxu0 0
  %1897 = vmatpush1.bf16.msra.mxu0 %v1883
  %1898 = vmatprep.subr.bf16.mxu0 0
  %1899 = vmatpush1.bf16.msra.mxu0 %v1884
  %1900 = vmatprep.subr.bf16.mxu0 0
  %1901 = vmatpush1.bf16.msra.mxu0 0
  %1902 = vmatprep.subr.bf16.mxu0 0
  %1903 = vmatpush1.bf16.msra.mxu0 0
  %1904 = vmatprep.subr.bf16.mxu0 0
  %1905 = vmatpush1.bf16.msra.mxu0 0
  %1906 = vmatprep.subr.bf16.mxu0 0
  %1907 = vmatpush1.bf16.msra.mxu0 0
  %1908 = vmatprep.subr.bf16.mxu0 0
  %1909 = vmatpush1.bf16.msra.mxu0 0
  %1910 = vmatprep.subr.bf16.mxu0 0
  %1911 = vmatpush1.bf16.msra.mxu0 0
  %1912 = vmatprep.subr.bf16.mxu0 0
  %1913 = vmatpush1.bf16.msra.mxu0 0
  %1914 = vmatprep.subr.bf16.mxu0 0
  %1915 = vmatpush1.bf16.msra.mxu0 0
  %1916 = vmatprep.subr.bf16.mxu0 0
  %1917 = vmatpush1.bf16.msra.mxu0 0
  %1918 = vmatprep.subr.bf16.mxu0 0
  %1919 = vmatpush1.bf16.msra.mxu0 0
  %1920 = vmatprep.subr.bf16.mxu0 0
  %1921 = vmatpush1.bf16.msra.mxu0 0
  %1922 = vmatprep.subr.bf16.mxu0 0
  %1923 = vmatpush1.bf16.msra.mxu0 0
  %1924 = vmatprep.subr.bf16.mxu0 0
  %1925 = vmatpush1.bf16.msra.mxu0 0
  %1926 = vmatprep.subr.bf16.mxu0 0
  %1927 = vmatpush1.bf16.msra.mxu0 0
  %1928 = vmatprep.mubr.bf16.mxu0 0
  %1929 = vmatmul.mubr.bf16.gmra.mrb[0].mxu0 %v1888
  %v1930 = vpop.f32.mrb[0].mxu0
  %v1931 = vadd.f32 %v1874, %v1930
  %v1932 = vpop.f32.mrb[0].mxu0
  %v1933 = vpop.f32.mrb[0].mxu0
  %v1934 = vadd.f32 %v1874, %v1933
  %v1935 = vpop.f32.mrb[0].mxu0
  %1936 = vmatprep.mubr.bf16.mxu0 0
  %1937 = vmatmul.mubr.bf16.gmra.mrb[0].mxu0 %v1891
  %v1938 = vpop.f32.mrb[0].mxu0
  %v1939 = vadd.f32 %v1874, %v1938
  %v1940 = vpop.f32.mrb[0].mxu0
  %v1941 = vpop.f32.mrb[0].mxu0
  %v1942 = vadd.f32 %v1874, %v1941
  %v1943 = vpop.f32.mrb[0].mxu0
  %1944 = vmatprep.mubr.bf16.mxu0 0
  %1945 = vmatmul.mubr.bf16.gmra.mrb[0].mxu0 %v1894
  %v1946 = vpop.f32.mrb[0].mxu0
  %v1947 = vadd.f32 %v1874, %v1946
  %v1948 = vpop.f32.mrb[0].mxu0
  %v1949 = vpop.f32.mrb[0].mxu0
  %v1950 = vadd.f32 %v1874, %v1949
  %v1951 = vpop.f32.mrb[0].mxu0
  %1952 = vdwg.mxu0
  %v1953 = vmul.f32 %v1931, %v1931
  %v1954 = vmul.f32 %v1934, %v1934
  %v1955 = vmul.f32 %v1939, %v1939
  %v1956 = vmul.f32 %v1942, %v1942
  %v1957 = vmul.f32 %v1947, %v1947
  %v1958 = vmul.f32 %v1950, %v1950
  %v1959 = vmul.f32 %v1931, %v1953
  %v1960 = vmul.f32 %v1934, %v1954
  %v1961 = vmul.f32 %v1939, %v1955
  %v1962 = vmul.f32 %v1942, %v1956
  %v1963 = vmul.f32 %v1947, %v1957
  %v1964 = vmul.f32 %v1950, %v1958
  %v1965 = vmul.f32 %v1959, 0.044715
  %v1966 = vmul.f32 %v1960, 0.044715
  %v1967 = vmul.f32 %v1961, 0.044715
  %v1968 = vmul.f32 %v1962, 0.044715
  %v1969 = vmul.f32 %v1963, 0.044715
  %v1970 = vmul.f32 %v1964, 0.044715
  %v1971 = vadd.f32 %v1931, %v1965
  %v1972 = vadd.f32 %v1934, %v1966
  %v1973 = vadd.f32 %v1939, %v1967
  %v1974 = vadd.f32 %v1942, %v1968
  %v1975 = vadd.f32 %v1947, %v1969
  %v1976 = vadd.f32 %v1950, %v1970
  %v1977 = vmul.f32 %v1971, 0.7978846
  %v1978 = vmul.f32 %v1972, 0.7978846
  %v1979 = vmul.f32 %v1973, 0.7978846
  %v1980 = vmul.f32 %v1974, 0.7978846
  %v1981 = vmul.f32 %v1975, 0.7978846
  %v1982 = vmul.f32 %v1976, 0.7978846
  %v1983 = vtanh.pop %v1977
  %v1984 = vtanh.pop %v1978
  %v1985 = vtanh.pop %v1979
  %v1986 = vtanh.pop %v1980
  %v1987 = vtanh.pop %v1981
  %v1988 = vtanh.pop %v1982
  %v1989 = vadd.f32 %v1983, 1.0
  %v1990 = vadd.f32 %v1984, 1.0
  %v1991 = vadd.f32 %v1985, 1.0
  %v1992 = vadd.f32 %v1986, 1.0
  %v1993 = vadd.f32 %v1987, 1.0
  %v1994 = vadd.f32 %v1988, 1.0
  %v1995 = vmul.f32 %v1989, 0.5
  %v1996 = vmul.f32 %v1990, 0.5
  %v1997 = vmul.f32 %v1991, 0.5
  %v1998 = vmul.f32 %v1992, 0.5
  %v1999 = vmul.f32 %v1993, 0.5
  %v2000 = vmul.f32 %v1994, 0.5
  %v2001 = vmul.f32 %v1931, %v1995
  %v2002 = vmul.f32 %v1934, %v1996
  %v2003 = vmul.f32 %v1939, %v1997
  %v2004 = vmul.f32 %v1942, %v1998
  %v2005 = vmul.f32 %v1947, %v1999
  %v2006 = vmul.f32 %v1950, %v2000
  %v2007 = vpack.c.bf16 %v2002, %v2001
  %v2008 = vpack.c.bf16 %v2004, %v2003
  %v2009 = vpack.c.bf16 %v2006, %v2005
  %s2010 = scalar_lea.vmem %s5, 64
  %v2011 = vld [vmem:[%s2010] sm:$0xf]
  %v2012 = vld [vmem:[%s2010 + $0x4] sm:$0xf]
  %v2013 = vld [vmem:[%s2010 + $0x8] sm:$0xf]
  %v2014 = vld [vmem:[%s2010 + $0xc] sm:$0xf]
  %v2015 = vld [vmem:[%s2010 + $0x10] sm:$0xf]
  %v2016 = vld [vmem:[%s2010 + $0x14] sm:$0xf]
  %v2017 = vld [vmem:[%s2010 + $0x18] sm:$0xf]
  %v2018 = vld [vmem:[%s2010 + $0x1c] sm:$0xf]
  %v2019 = vld [vmem:[%s2010 + $0x20] sm:$0xf]
  %v2020 = vld [vmem:[%s2010 + $0x24] sm:$0xf]
  %v2021 = vld [vmem:[%s2010 + $0x28] sm:$0xf]
  %v2022 = vld [vmem:[%s2010 + $0x2c] sm:$0xf]
  %v2023 = vld [vmem:[%s2010 + $0x30] sm:$0xf]
  %v2024 = vld [vmem:[%s2010 + $0x34] sm:$0xf]
  %v2025 = vld [vmem:[%s2010 + $0x38] sm:$0xf]
  %v2026 = vld [vmem:[%s2010 + $0x3c] sm:$0xf]
  %v2027 = vlaneseq
  %v2028 = vshrl.u32 %v2027, 7
  %v2029 = vsub.s32 0, %v2028
  %v2030 = vrot.slane %v1159, %v2029
  %v2047 = vunpack.c.l.b16 %v2011
  %v2048 = vunpack.c.l.b16 %v2012
  %v2049 = vunpack.c.l.b16 %v2013
  %v2050 = vunpack.c.l.b16 %v2014
  %v2051 = vunpack.c.l.b16 %v2015
  %v2052 = vunpack.c.l.b16 %v2016
  %v2053 = vunpack.c.l.b16 %v2017
  %v2054 = vunpack.c.l.b16 %v2018
  %v2055 = vunpack.c.l.b16 %v2019
  %v2056 = vunpack.c.l.b16 %v2020
  %v2057 = vunpack.c.l.b16 %v2021
  %v2058 = vunpack.c.l.b16 %v2022
  %v2059 = vunpack.c.l.b16 %v2023
  %v2060 = vunpack.c.l.b16 %v2024
  %v2061 = vunpack.c.l.b16 %v2025
  %v2062 = vunpack.c.l.b16 %v2026
  %v2063 = vpack.c.b16 %v2048, %v2047
  %v2064 = vpack.c.b16 %v2050, %v2049
  %v2065 = vpack.c.b16 %v2052, %v2051
  %v2066 = vpack.c.b16 %v2054, %v2053
  %v2067 = vpack.c.b16 %v2056, %v2055
  %v2068 = vpack.c.b16 %v2058, %v2057
  %v2069 = vpack.c.b16 %v2060, %v2059
  %v2070 = vpack.c.b16 %v2062, %v2061
  %2079 = vmatprep.subr.bf16.mxu0 0
  %2080 = vmatpush1.bf16.msra.mxu0 %v2063
  %2081 = vmatprep.subr.bf16.mxu0 0
  %2082 = vmatpush1.bf16.msra.mxu0 %v2064
  %2083 = vmatprep.subr.bf16.mxu0 0
  %2084 = vmatpush1.bf16.msra.mxu0 %v2065
  %2085 = vmatprep.subr.bf16.mxu0 0
  %2086 = vmatpush1.bf16.msra.mxu0 %v2066
  %2087 = vmatprep.subr.bf16.mxu0 0
  %2088 = vmatpush1.bf16.msra.mxu0 %v2067
  %2089 = vmatprep.subr.bf16.mxu0 0
  %2090 = vmatpush1.bf16.msra.mxu0 %v2068
  %2091 = vmatprep.subr.bf16.mxu0 0
  %2092 = vmatpush1.bf16.msra.mxu0 %v2069
  %2093 = vmatprep.subr.bf16.mxu0 0
  %2094 = vmatpush1.bf16.msra.mxu0 %v2070
  %2095 = vmatprep.subr.bf16.mxu0 0
  %2096 = vmatpush1.bf16.msra.mxu0 0
  %2097 = vmatprep.subr.bf16.mxu0 0
  %2098 = vmatpush1.bf16.msra.mxu0 0
  %2099 = vmatprep.subr.bf16.mxu0 0
  %2100 = vmatpush1.bf16.msra.mxu0 0
  %2101 = vmatprep.subr.bf16.mxu0 0
  %2102 = vmatpush1.bf16.msra.mxu0 0
  %2103 = vmatprep.subr.bf16.mxu0 0
  %2104 = vmatpush1.bf16.msra.mxu0 0
  %2105 = vmatprep.subr.bf16.mxu0 0
  %2106 = vmatpush1.bf16.msra.mxu0 0
  %2107 = vmatprep.subr.bf16.mxu0 0
  %2108 = vmatpush1.bf16.msra.mxu0 0
  %2109 = vmatprep.subr.bf16.mxu0 0
  %2110 = vmatpush1.bf16.msra.mxu0 0
  %2111 = vmatprep.mubr.bf16.mxu0 0
  %2112 = vmatmul.mubr.bf16.gmra.mrb[0].mxu0 %v2007
  %v2113 = vpop.f32.mrb[0].mxu0
  %v2114 = vadd.f32 %v2030, %v2113
  %v2115 = vpop.f32.mrb[0].mxu0
  %v2116 = vpop.f32.mrb[0].mxu0
  %v2117 = vadd.f32 %v2030, %v2116
  %v2118 = vpop.f32.mrb[0].mxu0
  %2119 = vmatprep.mubr.bf16.mxu0 0
  %2120 = vmatmul.mubr.bf16.gmra.mrb[0].mxu0 %v2008
  %v2121 = vpop.f32.mrb[0].mxu0
  %v2122 = vadd.f32 %v2030, %v2121
  %v2123 = vpop.f32.mrb[0].mxu0
  %v2124 = vpop.f32.mrb[0].mxu0
  %v2125 = vadd.f32 %v2030, %v2124
  %v2126 = vpop.f32.mrb[0].mxu0
  %2127 = vmatprep.mubr.bf16.mxu0 0
  %2128 = vmatmul.mubr.bf16.gmra.mrb[0].mxu0 %v2009
  %v2129 = vpop.f32.mrb[0].mxu0
  %v2130 = vadd.f32 %v2030, %v2129
  %v2131 = vpop.f32.mrb[0].mxu0
  %v2132 = vpop.f32.mrb[0].mxu0
  %v2133 = vadd.f32 %v2030, %v2132
  %v2134 = vpop.f32.mrb[0].mxu0
  %2135 = vdwg.mxu0
  %v2136 = vadd.f32 %v1759, %v2114
  %v2137 = vadd.f32 %v1760, %v2117
  %v2138 = vadd.f32 %v1761, %v2122
  %v2139 = vadd.f32 %v1762, %v2125
  %v2140 = vadd.f32 %v1763, %v2130
  %v2141 = vadd.f32 %v1764, %v2133
  %v2142 = vpack.c.bf16 %v2137, %v2136
  %v2143 = vpack.c.bf16 %v2139, %v2138
  %v2144 = vpack.c.bf16 %v2141, %v2140
  %v2145 = vld [vmem:[%s6] sm:$0xf]
  %v2146 = vld [vmem:[%s6 + $0x4] sm:$0xf]
  %v2147 = vld [vmem:[%s6 + $0x8] sm:$0xf]
  %v2148 = vld [vmem:[%s6 + $0xc] sm:$0xf]
  %v2149 = vlaneseq
  %v2150 = vshrl.u32 %v2149, 7
  %v2151 = vsub.s32 0, %v2150
  %v2152 = vrot.slane %v47, %v2151
  %v2157 = vunpack.c.l.b16 %v2145
  %v2158 = vunpack.c.l.b16 %v2146
  %v2159 = vunpack.c.l.b16 %v2147
  %v2160 = vunpack.c.l.b16 %v2148
  %v2161 = vpack.c.b16 %v2158, %v2157
  %v2162 = vpack.c.b16 %v2160, %v2159
  %v2166 = vsel %vm163, %v2142, 0
  %v2169 = vsel %vm163, %v2143, 0
  %v2172 = vsel %vm163, %v2144, 0
  %2174 = vmatprep.subr.bf16.mxu0 0
  %2175 = vmatpush1.bf16.msra.mxu0 %v2161
  %2176 = vmatprep.subr.bf16.mxu0 0
  %2177 = vmatpush1.bf16.msra.mxu0 %v2162
  %2178 = vmatprep.subr.bf16.mxu0 0
  %2179 = vmatpush1.bf16.msra.mxu0 0
  %2180 = vmatprep.subr.bf16.mxu0 0
  %2181 = vmatpush1.bf16.msra.mxu0 0
  %2182 = vmatprep.subr.bf16.mxu0 0
  %2183 = vmatpush1.bf16.msra.mxu0 0
  %2184 = vmatprep.subr.bf16.mxu0 0
  %2185 = vmatpush1.bf16.msra.mxu0 0
  %2186 = vmatprep.subr.bf16.mxu0 0
  %2187 = vmatpush1.bf16.msra.mxu0 0
  %2188 = vmatprep.subr.bf16.mxu0 0
  %2189 = vmatpush1.bf16.msra.mxu0 0
  %2190 = vmatprep.subr.bf16.mxu0 0
  %2191 = vmatpush1.bf16.msra.mxu0 0
  %2192 = vmatprep.subr.bf16.mxu0 0
  %2193 = vmatpush1.bf16.msra.mxu0 0
  %2194 = vmatprep.subr.bf16.mxu0 0
  %2195 = vmatpush1.bf16.msra.mxu0 0
  %2196 = vmatprep.subr.bf16.mxu0 0
  %2197 = vmatpush1.bf16.msra.mxu0 0
  %2198 = vmatprep.subr.bf16.mxu0 0
  %2199 = vmatpush1.bf16.msra.mxu0 0
  %2200 = vmatprep.subr.bf16.mxu0 0
  %2201 = vmatpush1.bf16.msra.mxu0 0
  %2202 = vmatprep.subr.bf16.mxu0 0
  %2203 = vmatpush1.bf16.msra.mxu0 0
  %2204 = vmatprep.subr.bf16.mxu0 0
  %2205 = vmatpush1.bf16.msra.mxu0 0
  %2206 = vmatprep.mubr.bf16.mxu0 0
  %2207 = vmatmul.mubr.bf16.gmra.mrb[0].mxu0 %v2166
  %v2208 = vpop.f32.mrb[0].mxu0
  %v2209 = vadd.f32 %v2152, %v2208
  %v2210 = vpop.f32.mrb[0].mxu0
  %v2211 = vpop.f32.mrb[0].mxu0
  %v2212 = vadd.f32 %v2152, %v2211
  %v2213 = vpop.f32.mrb[0].mxu0
  %2214 = vmatprep.mubr.bf16.mxu0 0
  %2215 = vmatmul.mubr.bf16.gmra.mrb[0].mxu0 %v2169
  %v2216 = vpop.f32.mrb[0].mxu0
  %v2217 = vadd.f32 %v2152, %v2216
  %v2218 = vpop.f32.mrb[0].mxu0
  %v2219 = vpop.f32.mrb[0].mxu0
  %v2220 = vadd.f32 %v2152, %v2219
  %v2221 = vpop.f32.mrb[0].mxu0
  %2222 = vmatprep.mubr.bf16.mxu0 0
  %2223 = vmatmul.mubr.bf16.gmra.mrb[0].mxu0 %v2172
  %v2224 = vpop.f32.mrb[0].mxu0
  %v2225 = vadd.f32 %v2152, %v2224
  %v2226 = vpop.f32.mrb[0].mxu0
  %v2227 = vpop.f32.mrb[0].mxu0
  %v2228 = vadd.f32 %v2152, %v2227
  %v2229 = vpop.f32.mrb[0].mxu0
  %2230 = vdwg.mxu0
  %2231 = vmax.xlane.f32.xlu0 %v2209
  %v2232 = vpop.xlane.xlu0 %2231
  %2233 = vmax.xlane.f32.xlu0 %v2212
  %v2234 = vpop.xlane.xlu0 %2233
  %2235 = vmax.xlane.f32.xlu0 %v2217
  %v2236 = vpop.xlane.xlu0 %2235
  %2237 = vmax.xlane.f32.xlu0 %v2220
  %v2238 = vpop.xlane.xlu0 %2237
  %2239 = vmax.xlane.f32.xlu0 %v2225
  %v2240 = vpop.xlane.xlu0 %2239
  %2241 = vmax.xlane.f32.xlu0 %v2228
  %v2242 = vpop.xlane.xlu0 %2241
  %v2243 = vsub.f32 %v2209, %v2232
  %v2244 = vsub.f32 %v2212, %v2234
  %v2245 = vsub.f32 %v2217, %v2236
  %v2246 = vsub.f32 %v2220, %v2238
  %v2247 = vsub.f32 %v2225, %v2240
  %v2248 = vsub.f32 %v2228, %v2242
  %v2249 = vmul.f32 %v2243, 1.442695
  %v2250 = vpow.pop %v2249
  %v2251 = vmul.f32 %v2244, 1.442695
  %v2252 = vpow.pop %v2251
  %v2253 = vmul.f32 %v2245, 1.442695
  %v2254 = vpow.pop %v2253
  %v2255 = vmul.f32 %v2246, 1.442695
  %v2256 = vpow.pop %v2255
  %v2257 = vmul.f32 %v2247, 1.442695
  %v2258 = vpow.pop %v2257
  %v2259 = vmul.f32 %v2248, 1.442695
  %v2260 = vpow.pop %v2259
  %2261 = vadd.xlane.f32.xlu0 %v2250
  %v2262 = vpop.xlane.xlu0 %2261
  %2263 = vadd.xlane.f32.xlu0 %v2252
  %v2264 = vpop.xlane.xlu0 %2263
  %2265 = vadd.xlane.f32.xlu0 %v2254
  %v2266 = vpop.xlane.xlu0 %2265
  %2267 = vadd.xlane.f32.xlu0 %v2256
  %v2268 = vpop.xlane.xlu0 %2267
  %2269 = vadd.xlane.f32.xlu0 %v2258
  %v2270 = vpop.xlane.xlu0 %2269
  %2271 = vadd.xlane.f32.xlu0 %v2260
  %v2272 = vpop.xlane.xlu0 %2271
  %v2273 = vrcp.pop %v2262
  %v2274 = vmul.f32 %v2250, %v2273
  %v2275 = vrcp.pop %v2264
  %v2276 = vmul.f32 %v2252, %v2275
  %v2277 = vrcp.pop %v2266
  %v2278 = vmul.f32 %v2254, %v2277
  %v2279 = vrcp.pop %v2268
  %v2280 = vmul.f32 %v2256, %v2279
  %v2281 = vrcp.pop %v2270
  %v2282 = vmul.f32 %v2258, %v2281
  %v2283 = vrcp.pop %v2272
  %v2284 = vmul.f32 %v2260, %v2283
  %2285 = vst [vmem:[%s7] sm:$0xff] %v2274
  %2286 = vst [vmem:[%s7 + $0x8] sm:$0xff] %v2276
  %2287 = vst [vmem:[%s7 + $0x10] sm:$0xff] %v2278
  %2288 = vst [vmem:[%s7 + $0x18] sm:$0xff] %v2280
  %2289 = vst [vmem:[%s7 + $0x20] sm:$0xff] %v2282
  %2290 = vst [vmem:[%s7 + $0x28] sm:$0xff] %v2284
  // Predicated region
  $region30: #{vit_forward_pallas.1} parent=0 // pred_check
    _
  $region31: #{vit_forward_pallas.1} parent=0 // pred_check_branch
    %2292 = sbr.rel (0) target = $region33
  $region32: #{vit_forward_pallas.1} parent=0 // pred_region
    _
  $region33: #{vit_forward_pallas.1} parent=0 // pred_fallthru
    _
  // Predicated region
  $region34: #{vit_forward_pallas.1} parent=0 // pred_check
    _
  $region35: #{vit_forward_pallas.1} parent=0 // pred_check_branch
    %2294 = sbr.rel (0) target = $region37
  $region36: #{vit_forward_pallas.1} parent=0 // pred_region
    _
  $region37: #{vit_forward_pallas.1} parent=0 // pred_fallthru
    _

</llo_original>
